<compile_context>
chip_gen: v7x
topology: tpu7x:2x2x1
jax: 0.10.0
libtpu: 0.0.40
codegen_flags: <defaults>
</compile_context>

<pallas_src>
import numpy as np

import jax
import jax.numpy as jnp
from jax.experimental import pallas as pl
from jax.experimental.pallas import tpu as pltpu


# ----------------------------------------------------------------------------
# Fused kernel: CNN (as matmuls) + fc + MS_TCN + head, TB batch elems / step.
# ----------------------------------------------------------------------------
def _t_cnn_tcn_kernel(x_ref, m1_ref, b1_ref, m2_ref, b2_ref, w3_ref, b3_ref,
                      wfc_ref, bfc_ref, wt1_ref, bt1_ref, wt2_ref, bt2_ref,
                      wh_ref, bh_ref, o_ref, pad_ref):
    f32 = jnp.float32
    bf16 = jnp.bfloat16

    R = x_ref.shape[0]                    # TB * T rows
    TB = pad_ref.shape[0]
    T = R // TB
    L, KC, Ct = wt1_ref.shape
    K = KC // Ct
    maxpad = pad_ref.shape[1] - T

    x = x_ref[...]                        # (R, Cin*H*W) bf16

    # ---- conv1(3->8,3x3,pad1)+ReLU+MaxPool2d(2,2): one (R,48)@(48,128) -----
    c1 = jnp.dot(x, m1_ref[...], preferred_element_type=f32)      # (R, 128)
    P1 = b1_ref.shape[-1]
    p1 = c1[:, :P1]
    for p in range(1, 4):
        p1 = jnp.maximum(p1, c1[:, p * P1:(p + 1) * P1])
    pool1 = jnp.maximum(p1 + b1_ref[...], 0.0).astype(bf16)       # (R, 32)

    # ---- conv2(8->16,3x3,pad1)+ReLU+MaxPool2d(2,2): one (R,32)@(32,64) -----
    c2 = jnp.dot(pool1, m2_ref[...], preferred_element_type=f32)  # (R, 64)
    P2 = b2_ref.shape[-1]
    p2 = c2[:, :P2]
    for p in range(1, 4):
        p2 = jnp.maximum(p2, c2[:, p * P2:(p + 1) * P2])
    pool2 = jnp.maximum(p2 + b2_ref[...], 0.0).astype(bf16)       # (R, 16)

    # ---- conv3(16->32,1x1)+ReLU (pool3 is identity), flatten ---------------
    h3 = jnp.dot(pool2, w3_ref[...], preferred_element_type=f32) + b3_ref[...]
    h3 = jnp.maximum(h3, 0.0).astype(bf16)                         # (R, 32)

    # ---- fc(32->64)+ReLU (dropout = eval no-op) ----------------------------
    y = jnp.dot(h3, wfc_ref[...], preferred_element_type=f32) + bfc_ref[...]
    y = jnp.maximum(y, 0.0)                                        # (R, 64) f32

    # ---- MS_TCN: dilated causal temporal blocks, identity residual ---------
    if maxpad > 0:                         # zero causal left-pad rows (cheap)
        pad_ref[:, pl.ds(0, maxpad), :] = jnp.zeros((TB, maxpad, Ct), f32)

    def causal_conv(h, w, b, dilation):
        # h: (R, Ct) f32; w: (K*Ct, Ct) bf16; b: (1, Ct) f32.
        pad_ref[:, pl.ds(maxpad, T), :] = h.reshape(TB, T, Ct)
        wins = []
        for k in range(K):                 # tap k sees x[t - (K-1-k)*dil]
            start = maxpad - (K - 1 - k) * dilation        # static, >= 0
            wins.append(pad_ref[:, pl.ds(start, T), :].reshape(R, Ct))
        im2col = jnp.concatenate(wins, axis=-1).astype(bf16)   # (R, K*Ct)
        out = jnp.dot(im2col, w, preferred_element_type=f32) + b
        return jnp.maximum(out, 0.0)

    for lvl in range(L):
        dil = 2 ** lvl
        res = y
        h = causal_conv(y, wt1_ref[lvl], bt1_ref[lvl], dil)
        g = causal_conv(h, wt2_ref[lvl], bt2_ref[lvl], dil)
        y = jnp.maximum(g + res, 0.0)                    # residual + ReLU

    # ---- head: fc1(64->nc) on the LAST time-step only (y already >= 0,
    #      so the spec's ReLU before fc1 is a no-op) -------------------------
    y_last = y.reshape(TB, T, Ct)[:, T - 1, :].astype(bf16)        # (TB, 64)
    logits = jnp.dot(y_last, wh_ref[...],
                     preferred_element_type=f32) + bh_ref[...]     # (TB, nc)
    o_ref[...] = logits.astype(o_ref.dtype)


# ----------------------------------------------------------------------------
# Wrapper
# ----------------------------------------------------------------------------
def t_cnn_tcn_forward(inputs, params, *, batch_block=32):
    """inputs: (N, T, 3, 4, 4) float32 -> logits (N, num_classes)."""
    N, T, Ci, H, W = inputs.shape
    assert Ci == 3 and H == 4 and W == 4, "cnn_tactile + fc(32,64) imply 3x4x4"
    feat = Ci * H * W

    num_levels, KC, Ct = params["wt1"].shape
    K = KC // Ct
    maxpad = (K - 1) * (2 ** (num_levels - 1))
    nc = params["wh"].shape[-1]

    # Batch block: TB*T rows per MXU push (TB=32 -> M=256 for v6e/v7x,
    # TB=16 -> M=128 fills v5e).  Keep >=2 grid steps when the whole batch
    # would otherwise be one step, so the v7x megacore can split it.
    TB = int(min(batch_block, N))
    if N == TB and N >= 16:
        TB = ((N + 1) // 2 + 7) // 8 * 8
    Npad = ((N + TB - 1) // TB) * TB

    x = inputs.reshape(N, T, feat)
    if Npad != N:
        x = jnp.pad(x, ((0, Npad - N), (0, 0), (0, 0)))
    x = x.reshape(Npad * T, feat).astype(jnp.bfloat16)

    names = ("m1", "b1", "m2", "b2", "w3", "b3", "wfc", "bfc",
             "wt1", "bt1", "wt2", "bt2", "wh", "bh")
    weights = [params[k] for k in names]

    def _const_map(ndim):
        return lambda n: (0,) * ndim

    in_specs = [pl.BlockSpec((TB * T, feat), lambda n: (n, 0))]
    in_specs += [pl.BlockSpec(w.shape, _const_map(w.ndim)) for w in weights]

    out = pl.pallas_call(
        _t_cnn_tcn_kernel,
        out_shape=jax.ShapeDtypeStruct((Npad, nc), jnp.float32),
        grid=(Npad // TB,),
        in_specs=in_specs,
        out_specs=pl.BlockSpec((TB, nc), lambda n: (n, 0)),
        scratch_shapes=[pltpu.VMEM((TB, maxpad + T, Ct), jnp.float32)],
        compiler_params=pltpu.CompilerParams(
            dimension_semantics=("parallel",)),
    )(x, *weights)

    return out[:N]


# ----------------------------------------------------------------------------
# Parameter construction: generate PyTorch-layout weights, then lower the
# tiny 2-D convs + max-pools to exact fused-matmul form.
# ----------------------------------------------------------------------------
def _conv3x3_pool_mats(w, b, hw):
    """Lower Conv2d(3x3, pad=1) on a (Cin, hw, hw) map followed by
    MaxPool2d(2,2) to 4 pooling-phase matrices (exact, including padding).

    Returns M: (4, Cin*hw*hw, Cout*(hw//2)**2) and bias row (1, Cout*(hw//2)**2).
    Column layout of the pooled output: (co * ho + oh) * ho + ow  (C-order).
    """
    Cout, Cin, KH, KW = w.shape
    ho = hw // 2
    M = np.zeros((4, Cin * hw * hw, Cout * ho * ho), np.float32)
    for p in range(4):
        ph, pw = divmod(p, 2)
        for oh in range(ho):
            for ow in range(ho):
                hc, wc = 2 * oh + ph, 2 * ow + pw      # conv-output pixel
                for co in range(Cout):
                    oi = (co * ho + oh) * ho + ow
                    for ci in range(Cin):
                        for kh in range(KH):
                            for kw in range(KW):
                                hi, wi = hc + kh - 1, wc + kw - 1
                                if 0 <= hi < hw and 0 <= wi < hw:
                                    ii = (ci * hw + hi) * hw + wi
                                    M[p, ii, oi] = w[co, ci, kh, kw]
    bias = np.repeat(np.asarray(b, np.float32), ho * ho)[None, :]
    return M, bias


def init_params(key, *, num_classes=2):
    ks = jax.random.split(key, 12)

    def rnd(k, shape, scale):
        return np.asarray(jax.random.normal(k, shape, jnp.float32)) * scale

    # cnn_tactile + fc (PyTorch layouts)
    w1 = rnd(ks[0], (8, 3, 3, 3), 0.20);   b1 = rnd(ks[1], (8,), 0.05)
    w2 = rnd(ks[2], (16, 8, 3, 3), 0.10);  b2 = rnd(ks[3], (16,), 0.05)
    w3 = rnd(ks[4], (32, 16, 1, 1), 0.15); b3 = rnd(ks[5], (32,), 0.05)
    wfc = rnd(ks[6], (64, 32), 0.15);      bfc = rnd(ks[7], (64,), 0.05)

    m1, b1v = _conv3x3_pool_mats(w1, b1, hw=4)         # (4,48,32), (1,32)
    m2, b2v = _conv3x3_pool_mats(w2, b2, hw=2)         # (4,32,16), (1,16)
    m1f = np.concatenate([m1[p] for p in range(4)], axis=1)   # (48, 128)
    m2f = np.concatenate([m2[p] for p in range(4)], axis=1)   # (32, 64)

    # MS_TCN: input_size=64, num_channels=[64,64], kernel_size=[5,5]
    C_t, num_levels, Kt = 64, 2, 5
    wt1 = np.zeros((num_levels, Kt * C_t, C_t), np.float32)
    wt2 = np.zeros_like(wt1)
    bt1 = np.zeros((num_levels, 1, C_t), np.float32)
    bt2 = np.zeros_like(bt1)
    for lvl in range(num_levels):
        kk = jax.random.split(jax.random.fold_in(ks[8], lvl), 4)
        w1t = rnd(kk[0], (C_t, C_t, Kt), 0.05)         # torch Conv1d layout
        w2t = rnd(kk[1], (C_t, C_t, Kt), 0.05)
        # im2col weight: row block k = W[:, :, k].T (tap k multiplies the
        # input at t - (K-1-k)*dil for a causal conv with chomp).
        wt1[lvl] = np.transpose(w1t, (2, 1, 0)).reshape(Kt * C_t, C_t)
        wt2[lvl] = np.transpose(w2t, (2, 1, 0)).reshape(Kt * C_t, C_t)
        bt1[lvl, 0] = rnd(kk[2], (C_t,), 0.02)
        bt2[lvl, 0] = rnd(kk[3], (C_t,), 0.02)

    wh = rnd(ks[9], (num_classes, 64), 0.15)           # fc1 torch layout
    bh = rnd(ks[10], (num_classes,), 0.02)

    bf = lambda a: jnp.asarray(a, jnp.bfloat16)
    f32 = lambda a: jnp.asarray(a, jnp.float32)
    return dict(
        m1=bf(m1f), b1=f32(b1v),
        m2=bf(m2f), b2=f32(b2v),
        w3=bf(w3[:, :, 0, 0].T), b3=f32(b3[None, :]),
        wfc=bf(wfc.T), bfc=f32(bfc[None, :]),
        wt1=bf(wt1), bt1=f32(bt1),
        wt2=bf(wt2), bt2=f32(bt2),
        wh=bf(wh.T), bh=f32(bh[None, :]),
    )


if __name__ == "__main__":
    key = jax.random.PRNGKey(0)
    k_in, k_par = jax.random.split(key)

    N, T, C_img, H, W = 2, 8, 3, 4, 4      # fc(32,64) implies 4x4 tactile maps
    num_classes = 2

    inputs = jax.random.normal(k_in, (N, T, C_img, H, W), jnp.float32)
    params = init_params(k_par, num_classes=num_classes)

    out = jax.jit(t_cnn_tcn_forward)(inputs, params)
    out = jax.block_until_ready(out)

    assert out.shape == (N, num_classes), out.shape
    assert bool(jnp.all(jnp.isfinite(out)))
    print("KERNEL_OK")
</pallas_src>

<mosaic_0001>
module attributes {stable_mosaic.version = 11 : i64} {
  func.func @_t_cnn_tcn_kernel(%arg0: i32, %arg1: memref<16x48xbf16, #tpu.memory_space<vmem>>, %arg2: memref<48x128xbf16, #tpu.memory_space<vmem>>, %arg3: memref<1x32xf32, #tpu.memory_space<vmem>>, %arg4: memref<32x64xbf16, #tpu.memory_space<vmem>>, %arg5: memref<1x16xf32, #tpu.memory_space<vmem>>, %arg6: memref<16x32xbf16, #tpu.memory_space<vmem>>, %arg7: memref<1x32xf32, #tpu.memory_space<vmem>>, %arg8: memref<32x64xbf16, #tpu.memory_space<vmem>>, %arg9: memref<1x64xf32, #tpu.memory_space<vmem>>, %arg10: memref<2x320x64xbf16, #tpu.memory_space<vmem>>, %arg11: memref<2x1x64xf32, #tpu.memory_space<vmem>>, %arg12: memref<2x320x64xbf16, #tpu.memory_space<vmem>>, %arg13: memref<2x1x64xf32, #tpu.memory_space<vmem>>, %arg14: memref<64x2xbf16, #tpu.memory_space<vmem>>, %arg15: memref<1x2xf32, #tpu.memory_space<vmem>>, %arg16: memref<2x2xf32, #tpu.memory_space<vmem>>, %arg17: memref<2x16x64xf32, #tpu.memory_space<vmem>>) attributes {dimension_semantics = [#tpu.dimension_semantics<parallel>], iteration_bounds = array<i64: 1>, scalar_prefetch = 0 : i64, scratch_operands = 1 : i64, tpu.core_type = #tpu.core_type<tc>, window_params = [{transform_indices = @transform_0, window_bounds = array<i64: 16, 48>}, {pipeline_mode = #tpu.pipeline_mode<synchronous>, transform_indices = @transform_1, window_bounds = array<i64: 48, 128>}, {pipeline_mode = #tpu.pipeline_mode<synchronous>, transform_indices = @transform_2, window_bounds = array<i64: 1, 32>}, {pipeline_mode = #tpu.pipeline_mode<synchronous>, transform_indices = @transform_3, window_bounds = array<i64: 32, 64>}, {pipeline_mode = #tpu.pipeline_mode<synchronous>, transform_indices = @transform_4, window_bounds = array<i64: 1, 16>}, {pipeline_mode = #tpu.pipeline_mode<synchronous>, transform_indices = @transform_5, window_bounds = array<i64: 16, 32>}, {pipeline_mode = #tpu.pipeline_mode<synchronous>, transform_indices = @transform_6, window_bounds = array<i64: 1, 32>}, {pipeline_mode = #tpu.pipeline_mode<synchronous>, transform_indices = @transform_7, window_bounds = array<i64: 32, 64>}, {pipeline_mode = #tpu.pipeline_mode<synchronous>, transform_indices = @transform_8, window_bounds = array<i64: 1, 64>}, {pipeline_mode = #tpu.pipeline_mode<synchronous>, transform_indices = @transform_9, window_bounds = array<i64: 2, 320, 64>}, {pipeline_mode = #tpu.pipeline_mode<synchronous>, transform_indices = @transform_10, window_bounds = array<i64: 2, 1, 64>}, {pipeline_mode = #tpu.pipeline_mode<synchronous>, transform_indices = @transform_11, window_bounds = array<i64: 2, 320, 64>}, {pipeline_mode = #tpu.pipeline_mode<synchronous>, transform_indices = @transform_12, window_bounds = array<i64: 2, 1, 64>}, {pipeline_mode = #tpu.pipeline_mode<synchronous>, transform_indices = @transform_13, window_bounds = array<i64: 64, 2>}, {pipeline_mode = #tpu.pipeline_mode<synchronous>, transform_indices = @transform_14, window_bounds = array<i64: 1, 2>}, {transform_indices = @transform_15, window_bounds = array<i64: 2, 2>}]} {
    %c0 = arith.constant 0 : index
    %c0_0 = arith.constant 0 : index
    %0 = vector.load %arg1[%c0, %c0_0] : memref<16x48xbf16, #tpu.memory_space<vmem>>, vector<16x48xbf16>
    %c0_1 = arith.constant 0 : index
    %c0_2 = arith.constant 0 : index
    %1 = vector.load %arg2[%c0_1, %c0_2] : memref<48x128xbf16, #tpu.memory_space<vmem>>, vector<48x128xbf16>
    %cst = arith.constant dense<0.000000e+00> : vector<16x128xf32>
    %2 = tpu.matmul %0, %1, %cst {dimension_numbers = #tpu.dot_dimension_numbers<[1], [0], [0], [1], [0, 0, 1, 1], [], []>} : vector<16x48xbf16>, vector<48x128xbf16>, vector<16x128xf32> -> vector<16x128xf32>
    %3 = vector.extract_strided_slice %2 {offsets = [0, 0], sizes = [16, 32], strides = [1, 1]} : vector<16x128xf32> to vector<16x32xf32>
    %4 = vector.extract_strided_slice %2 {offsets = [0, 32], sizes = [16, 32], strides = [1, 1]} : vector<16x128xf32> to vector<16x32xf32>
    %5 = arith.maximumf %3, %4 : vector<16x32xf32>
    %6 = vector.extract_strided_slice %2 {offsets = [0, 64], sizes = [16, 32], strides = [1, 1]} : vector<16x128xf32> to vector<16x32xf32>
    %7 = arith.maximumf %5, %6 : vector<16x32xf32>
    %8 = vector.extract_strided_slice %2 {offsets = [0, 96], sizes = [16, 32], strides = [1, 1]} : vector<16x128xf32> to vector<16x32xf32>
    %9 = arith.maximumf %7, %8 : vector<16x32xf32>
    %c0_3 = arith.constant 0 : index
    %c0_4 = arith.constant 0 : index
    %10 = vector.load %arg3[%c0_3, %c0_4] : memref<1x32xf32, #tpu.memory_space<vmem>>, vector<1x32xf32>
    %11 = vector.broadcast %10 : vector<1x32xf32> to vector<16x32xf32>
    %12 = arith.addf %9, %11 : vector<16x32xf32>
    %cst_5 = arith.constant 0.000000e+00 : f32
    %13 = vector.broadcast %cst_5 : f32 to vector<16x32xf32>
    %14 = arith.maximumf %12, %13 : vector<16x32xf32>
    %15 = arith.truncf %14 : vector<16x32xf32> to vector<16x32xbf16>
    %c0_6 = arith.constant 0 : index
    %c0_7 = arith.constant 0 : index
    %16 = vector.load %arg4[%c0_6, %c0_7] : memref<32x64xbf16, #tpu.memory_space<vmem>>, vector<32x64xbf16>
    %cst_8 = arith.constant dense<0.000000e+00> : vector<16x64xf32>
    %17 = tpu.matmul %15, %16, %cst_8 {dimension_numbers = #tpu.dot_dimension_numbers<[1], [0], [0], [1], [0, 0, 1, 1], [], []>} : vector<16x32xbf16>, vector<32x64xbf16>, vector<16x64xf32> -> vector<16x64xf32>
    %18 = vector.extract_strided_slice %17 {offsets = [0, 0], sizes = [16, 16], strides = [1, 1]} : vector<16x64xf32> to vector<16x16xf32>
    %19 = vector.extract_strided_slice %17 {offsets = [0, 16], sizes = [16, 16], strides = [1, 1]} : vector<16x64xf32> to vector<16x16xf32>
    %20 = arith.maximumf %18, %19 : vector<16x16xf32>
    %21 = vector.extract_strided_slice %17 {offsets = [0, 32], sizes = [16, 16], strides = [1, 1]} : vector<16x64xf32> to vector<16x16xf32>
    %22 = arith.maximumf %20, %21 : vector<16x16xf32>
    %23 = vector.extract_strided_slice %17 {offsets = [0, 48], sizes = [16, 16], strides = [1, 1]} : vector<16x64xf32> to vector<16x16xf32>
    %24 = arith.maximumf %22, %23 : vector<16x16xf32>
    %c0_9 = arith.constant 0 : index
    %c0_10 = arith.constant 0 : index
    %25 = vector.load %arg5[%c0_9, %c0_10] : memref<1x16xf32, #tpu.memory_space<vmem>>, vector<1x16xf32>
    %26 = vector.broadcast %25 : vector<1x16xf32> to vector<16x16xf32>
    %27 = arith.addf %24, %26 : vector<16x16xf32>
    %cst_11 = arith.constant 0.000000e+00 : f32
    %28 = vector.broadcast %cst_11 : f32 to vector<16x16xf32>
    %29 = arith.maximumf %27, %28 : vector<16x16xf32>
    %30 = arith.truncf %29 : vector<16x16xf32> to vector<16x16xbf16>
    %c0_12 = arith.constant 0 : index
    %c0_13 = arith.constant 0 : index
    %31 = vector.load %arg6[%c0_12, %c0_13] : memref<16x32xbf16, #tpu.memory_space<vmem>>, vector<16x32xbf16>
    %cst_14 = arith.constant dense<0.000000e+00> : vector<16x32xf32>
    %32 = tpu.matmul %30, %31, %cst_14 {dimension_numbers = #tpu.dot_dimension_numbers<[1], [0], [0], [1], [0, 0, 1, 1], [], []>} : vector<16x16xbf16>, vector<16x32xbf16>, vector<16x32xf32> -> vector<16x32xf32>
    %c0_15 = arith.constant 0 : index
    %c0_16 = arith.constant 0 : index
    %33 = vector.load %arg7[%c0_15, %c0_16] : memref<1x32xf32, #tpu.memory_space<vmem>>, vector<1x32xf32>
    %34 = vector.broadcast %33 : vector<1x32xf32> to vector<16x32xf32>
    %35 = arith.addf %32, %34 : vector<16x32xf32>
    %cst_17 = arith.constant 0.000000e+00 : f32
    %36 = vector.broadcast %cst_17 : f32 to vector<16x32xf32>
    %37 = arith.maximumf %35, %36 : vector<16x32xf32>
    %38 = arith.truncf %37 : vector<16x32xf32> to vector<16x32xbf16>
    %c0_18 = arith.constant 0 : index
    %c0_19 = arith.constant 0 : index
    %39 = vector.load %arg8[%c0_18, %c0_19] : memref<32x64xbf16, #tpu.memory_space<vmem>>, vector<32x64xbf16>
    %cst_20 = arith.constant dense<0.000000e+00> : vector<16x64xf32>
    %40 = tpu.matmul %38, %39, %cst_20 {dimension_numbers = #tpu.dot_dimension_numbers<[1], [0], [0], [1], [0, 0, 1, 1], [], []>} : vector<16x32xbf16>, vector<32x64xbf16>, vector<16x64xf32> -> vector<16x64xf32>
    %c0_21 = arith.constant 0 : index
    %c0_22 = arith.constant 0 : index
    %41 = vector.load %arg9[%c0_21, %c0_22] : memref<1x64xf32, #tpu.memory_space<vmem>>, vector<1x64xf32>
    %42 = vector.broadcast %41 : vector<1x64xf32> to vector<16x64xf32>
    %43 = arith.addf %40, %42 : vector<16x64xf32>
    %cst_23 = arith.constant 0.000000e+00 : f32
    %44 = vector.broadcast %cst_23 : f32 to vector<16x64xf32>
    %45 = arith.maximumf %43, %44 : vector<16x64xf32>
    %cst_24 = arith.constant 0.000000e+00 : f32
    %46 = vector.broadcast %cst_24 : f32 to vector<2x8x64xf32>
    %c0_25 = arith.constant 0 : index
    %c0_26 = arith.constant 0 : index
    %c0_27 = arith.constant 0 : index
    %47 = vector.load %arg17[%c0_25, %c0_26, %c0_27] : memref<2x16x64xf32, #tpu.memory_space<vmem>>, vector<2x8x64xf32>
    tpu.vector_store %arg17[%c0_25, %c0_26, %c0_27], %46 {strides = array<i32>} : memref<2x16x64xf32, #tpu.memory_space<vmem>>, vector<2x8x64xf32>,
    %c0_28 = arith.constant 0 : index
    %c0_29 = arith.constant 0 : index
    %c0_30 = arith.constant 0 : index
    %48 = vector.load %arg10[%c0_28, %c0_29, %c0_30] : memref<2x320x64xbf16, #tpu.memory_space<vmem>>, vector<1x320x64xbf16>
    %49 = vector.shape_cast %48 : vector<1x320x64xbf16> to vector<320x64xbf16>
    %c0_31 = arith.constant 0 : index
    %c0_32 = arith.constant 0 : index
    %c0_33 = arith.constant 0 : index
    %50 = vector.load %arg11[%c0_31, %c0_32, %c0_33] : memref<2x1x64xf32, #tpu.memory_space<vmem>>, vector<1x1x64xf32>
    %51 = vector.shape_cast %50 : vector<1x1x64xf32> to vector<1x64xf32>
    %52 = vector.shape_cast %45 : vector<16x64xf32> to vector<2x8x64xf32>
    %c0_34 = arith.constant 0 : index
    %c8 = arith.constant 8 : index
    %c0_35 = arith.constant 0 : index
    %53 = vector.load %arg17[%c0_34, %c8, %c0_35] : memref<2x16x64xf32, #tpu.memory_space<vmem>>, vector<2x8x64xf32>
    tpu.vector_store %arg17[%c0_34, %c8, %c0_35], %52 {strides = array<i32>} : memref<2x16x64xf32, #tpu.memory_space<vmem>>, vector<2x8x64xf32>,
    %c0_36 = arith.constant 0 : index
    %c4 = arith.constant 4 : index
    %c0_37 = arith.constant 0 : index
    %54 = vector.load %arg17[%c0_36, %c4, %c0_37] : memref<2x16x64xf32, #tpu.memory_space<vmem>>, vector<2x8x64xf32>
    %55 = vector.shape_cast %54 : vector<2x8x64xf32> to vector<16x64xf32>
    %c0_38 = arith.constant 0 : index
    %c5 = arith.constant 5 : index
    %c0_39 = arith.constant 0 : index
    %56 = vector.load %arg17[%c0_38, %c5, %c0_39] : memref<2x16x64xf32, #tpu.memory_space<vmem>>, vector<2x8x64xf32>
    %57 = vector.shape_cast %56 : vector<2x8x64xf32> to vector<16x64xf32>
    %c0_40 = arith.constant 0 : index
    %c6 = arith.constant 6 : index
    %c0_41 = arith.constant 0 : index
    %58 = vector.load %arg17[%c0_40, %c6, %c0_41] : memref<2x16x64xf32, #tpu.memory_space<vmem>>, vector<2x8x64xf32>
    %59 = vector.shape_cast %58 : vector<2x8x64xf32> to vector<16x64xf32>
    %c0_42 = arith.constant 0 : index
    %c7 = arith.constant 7 : index
    %c0_43 = arith.constant 0 : index
    %60 = vector.load %arg17[%c0_42, %c7, %c0_43] : memref<2x16x64xf32, #tpu.memory_space<vmem>>, vector<2x8x64xf32>
    %61 = vector.shape_cast %60 : vector<2x8x64xf32> to vector<16x64xf32>
    %c0_44 = arith.constant 0 : index
    %c8_45 = arith.constant 8 : index
    %c0_46 = arith.constant 0 : index
    %62 = vector.load %arg17[%c0_44, %c8_45, %c0_46] : memref<2x16x64xf32, #tpu.memory_space<vmem>>, vector<2x8x64xf32>
    %63 = vector.shape_cast %62 : vector<2x8x64xf32> to vector<16x64xf32>
    %64 = tpu.concatenate %55, %57, %59, %61, %63 in 1 : vector<16x64xf32>, vector<16x64xf32>, vector<16x64xf32>, vector<16x64xf32>, vector<16x64xf32> -> vector<16x320xf32>
    %65 = arith.truncf %64 : vector<16x320xf32> to vector<16x320xbf16>
    %cst_47 = arith.constant dense<0.000000e+00> : vector<16x64xf32>
    %66 = tpu.matmul %65, %49, %cst_47 {dimension_numbers = #tpu.dot_dimension_numbers<[1], [0], [0], [1], [0, 0, 1, 1], [], []>} : vector<16x320xbf16>, vector<320x64xbf16>, vector<16x64xf32> -> vector<16x64xf32>
    %67 = vector.broadcast %51 : vector<1x64xf32> to vector<16x64xf32>
    %68 = arith.addf %66, %67 : vector<16x64xf32>
    %cst_48 = arith.constant 0.000000e+00 : f32
    %69 = vector.broadcast %cst_48 : f32 to vector<16x64xf32>
    %70 = arith.maximumf %68, %69 : vector<16x64xf32>
    %c0_49 = arith.constant 0 : index
    %c0_50 = arith.constant 0 : index
    %c0_51 = arith.constant 0 : index
    %71 = vector.load %arg12[%c0_49, %c0_50, %c0_51] : memref<2x320x64xbf16, #tpu.memory_space<vmem>>, vector<1x320x64xbf16>
    %72 = vector.shape_cast %71 : vector<1x320x64xbf16> to vector<320x64xbf16>
    %c0_52 = arith.constant 0 : index
    %c0_53 = arith.constant 0 : index
    %c0_54 = arith.constant 0 : index
    %73 = vector.load %arg13[%c0_52, %c0_53, %c0_54] : memref<2x1x64xf32, #tpu.memory_space<vmem>>, vector<1x1x64xf32>
    %74 = vector.shape_cast %73 : vector<1x1x64xf32> to vector<1x64xf32>
    %75 = vector.shape_cast %70 : vector<16x64xf32> to vector<2x8x64xf32>
    %c0_55 = arith.constant 0 : index
    %c8_56 = arith.constant 8 : index
    %c0_57 = arith.constant 0 : index
    %76 = vector.load %arg17[%c0_55, %c8_56, %c0_57] : memref<2x16x64xf32, #tpu.memory_space<vmem>>, vector<2x8x64xf32>
    tpu.vector_store %arg17[%c0_55, %c8_56, %c0_57], %75 {strides = array<i32>} : memref<2x16x64xf32, #tpu.memory_space<vmem>>, vector<2x8x64xf32>,
    %c0_58 = arith.constant 0 : index
    %c4_59 = arith.constant 4 : index
    %c0_60 = arith.constant 0 : index
    %77 = vector.load %arg17[%c0_58, %c4_59, %c0_60] : memref<2x16x64xf32, #tpu.memory_space<vmem>>, vector<2x8x64xf32>
    %78 = vector.shape_cast %77 : vector<2x8x64xf32> to vector<16x64xf32>
    %c0_61 = arith.constant 0 : index
    %c5_62 = arith.constant 5 : index
    %c0_63 = arith.constant 0 : index
    %79 = vector.load %arg17[%c0_61, %c5_62, %c0_63] : memref<2x16x64xf32, #tpu.memory_space<vmem>>, vector<2x8x64xf32>
    %80 = vector.shape_cast %79 : vector<2x8x64xf32> to vector<16x64xf32>
    %c0_64 = arith.constant 0 : index
    %c6_65 = arith.constant 6 : index
    %c0_66 = arith.constant 0 : index
    %81 = vector.load %arg17[%c0_64, %c6_65, %c0_66] : memref<2x16x64xf32, #tpu.memory_space<vmem>>, vector<2x8x64xf32>
    %82 = vector.shape_cast %81 : vector<2x8x64xf32> to vector<16x64xf32>
    %c0_67 = arith.constant 0 : index
    %c7_68 = arith.constant 7 : index
    %c0_69 = arith.constant 0 : index
    %83 = vector.load %arg17[%c0_67, %c7_68, %c0_69] : memref<2x16x64xf32, #tpu.memory_space<vmem>>, vector<2x8x64xf32>
    %84 = vector.shape_cast %83 : vector<2x8x64xf32> to vector<16x64xf32>
    %c0_70 = arith.constant 0 : index
    %c8_71 = arith.constant 8 : index
    %c0_72 = arith.constant 0 : index
    %85 = vector.load %arg17[%c0_70, %c8_71, %c0_72] : memref<2x16x64xf32, #tpu.memory_space<vmem>>, vector<2x8x64xf32>
    %86 = vector.shape_cast %85 : vector<2x8x64xf32> to vector<16x64xf32>
    %87 = tpu.concatenate %78, %80, %82, %84, %86 in 1 : vector<16x64xf32>, vector<16x64xf32>, vector<16x64xf32>, vector<16x64xf32>, vector<16x64xf32> -> vector<16x320xf32>
    %88 = arith.truncf %87 : vector<16x320xf32> to vector<16x320xbf16>
    %cst_73 = arith.constant dense<0.000000e+00> : vector<16x64xf32>
    %89 = tpu.matmul %88, %72, %cst_73 {dimension_numbers = #tpu.dot_dimension_numbers<[1], [0], [0], [1], [0, 0, 1, 1], [], []>} : vector<16x320xbf16>, vector<320x64xbf16>, vector<16x64xf32> -> vector<16x64xf32>
    %90 = vector.broadcast %74 : vector<1x64xf32> to vector<16x64xf32>
    %91 = arith.addf %89, %90 : vector<16x64xf32>
    %cst_74 = arith.constant 0.000000e+00 : f32
    %92 = vector.broadcast %cst_74 : f32 to vector<16x64xf32>
    %93 = arith.maximumf %91, %92 : vector<16x64xf32>
    %94 = arith.addf %93, %45 : vector<16x64xf32>
    %cst_75 = arith.constant 0.000000e+00 : f32
    %95 = vector.broadcast %cst_75 : f32 to vector<16x64xf32>
    %96 = arith.maximumf %94, %95 : vector<16x64xf32>
    %c1 = arith.constant 1 : index
    %c0_76 = arith.constant 0 : index
    %c0_77 = arith.constant 0 : index
    %97 = vector.load %arg10[%c1, %c0_76, %c0_77] : memref<2x320x64xbf16, #tpu.memory_space<vmem>>, vector<1x320x64xbf16>
    %98 = vector.shape_cast %97 : vector<1x320x64xbf16> to vector<320x64xbf16>
    %c1_78 = arith.constant 1 : index
    %c0_79 = arith.constant 0 : index
    %c0_80 = arith.constant 0 : index
    %99 = vector.load %arg11[%c1_78, %c0_79, %c0_80] : memref<2x1x64xf32, #tpu.memory_space<vmem>>, vector<1x1x64xf32>
    %100 = vector.shape_cast %99 : vector<1x1x64xf32> to vector<1x64xf32>
    %101 = vector.shape_cast %96 : vector<16x64xf32> to vector<2x8x64xf32>
    %c0_81 = arith.constant 0 : index
    %c8_82 = arith.constant 8 : index
    %c0_83 = arith.constant 0 : index
    %102 = vector.load %arg17[%c0_81, %c8_82, %c0_83] : memref<2x16x64xf32, #tpu.memory_space<vmem>>, vector<2x8x64xf32>
    tpu.vector_store %arg17[%c0_81, %c8_82, %c0_83], %101 {strides = array<i32>} : memref<2x16x64xf32, #tpu.memory_space<vmem>>, vector<2x8x64xf32>,
    %c0_84 = arith.constant 0 : index
    %c0_85 = arith.constant 0 : index
    %c0_86 = arith.constant 0 : index
    %103 = vector.load %arg17[%c0_84, %c0_85, %c0_86] : memref<2x16x64xf32, #tpu.memory_space<vmem>>, vector<2x8x64xf32>
    %104 = vector.shape_cast %103 : vector<2x8x64xf32> to vector<16x64xf32>
    %c0_87 = arith.constant 0 : index
    %c2 = arith.constant 2 : index
    %c0_88 = arith.constant 0 : index
    %105 = vector.load %arg17[%c0_87, %c2, %c0_88] : memref<2x16x64xf32, #tpu.memory_space<vmem>>, vector<2x8x64xf32>
    %106 = vector.shape_cast %105 : vector<2x8x64xf32> to vector<16x64xf32>
    %c0_89 = arith.constant 0 : index
    %c4_90 = arith.constant 4 : index
    %c0_91 = arith.constant 0 : index
    %107 = vector.load %arg17[%c0_89, %c4_90, %c0_91] : memref<2x16x64xf32, #tpu.memory_space<vmem>>, vector<2x8x64xf32>
    %108 = vector.shape_cast %107 : vector<2x8x64xf32> to vector<16x64xf32>
    %c0_92 = arith.constant 0 : index
    %c6_93 = arith.constant 6 : index
    %c0_94 = arith.constant 0 : index
    %109 = vector.load %arg17[%c0_92, %c6_93, %c0_94] : memref<2x16x64xf32, #tpu.memory_space<vmem>>, vector<2x8x64xf32>
    %110 = vector.shape_cast %109 : vector<2x8x64xf32> to vector<16x64xf32>
    %c0_95 = arith.constant 0 : index
    %c8_96 = arith.constant 8 : index
    %c0_97 = arith.constant 0 : index
    %111 = vector.load %arg17[%c0_95, %c8_96, %c0_97] : memref<2x16x64xf32, #tpu.memory_space<vmem>>, vector<2x8x64xf32>
    %112 = vector.shape_cast %111 : vector<2x8x64xf32> to vector<16x64xf32>
    %113 = tpu.concatenate %104, %106, %108, %110, %112 in 1 : vector<16x64xf32>, vector<16x64xf32>, vector<16x64xf32>, vector<16x64xf32>, vector<16x64xf32> -> vector<16x320xf32>
    %114 = arith.truncf %113 : vector<16x320xf32> to vector<16x320xbf16>
    %cst_98 = arith.constant dense<0.000000e+00> : vector<16x64xf32>
    %115 = tpu.matmul %114, %98, %cst_98 {dimension_numbers = #tpu.dot_dimension_numbers<[1], [0], [0], [1], [0, 0, 1, 1], [], []>} : vector<16x320xbf16>, vector<320x64xbf16>, vector<16x64xf32> -> vector<16x64xf32>
    %116 = vector.broadcast %100 : vector<1x64xf32> to vector<16x64xf32>
    %117 = arith.addf %115, %116 : vector<16x64xf32>
    %cst_99 = arith.constant 0.000000e+00 : f32
    %118 = vector.broadcast %cst_99 : f32 to vector<16x64xf32>
    %119 = arith.maximumf %117, %118 : vector<16x64xf32>
    %c1_100 = arith.constant 1 : index
    %c0_101 = arith.constant 0 : index
    %c0_102 = arith.constant 0 : index
    %120 = vector.load %arg12[%c1_100, %c0_101, %c0_102] : memref<2x320x64xbf16, #tpu.memory_space<vmem>>, vector<1x320x64xbf16>
    %121 = vector.shape_cast %120 : vector<1x320x64xbf16> to vector<320x64xbf16>
    %c1_103 = arith.constant 1 : index
    %c0_104 = arith.constant 0 : index
    %c0_105 = arith.constant 0 : index
    %122 = vector.load %arg13[%c1_103, %c0_104, %c0_105] : memref<2x1x64xf32, #tpu.memory_space<vmem>>, vector<1x1x64xf32>
    %123 = vector.shape_cast %122 : vector<1x1x64xf32> to vector<1x64xf32>
    %124 = vector.shape_cast %119 : vector<16x64xf32> to vector<2x8x64xf32>
    %c0_106 = arith.constant 0 : index
    %c8_107 = arith.constant 8 : index
    %c0_108 = arith.constant 0 : index
    %125 = vector.load %arg17[%c0_106, %c8_107, %c0_108] : memref<2x16x64xf32, #tpu.memory_space<vmem>>, vector<2x8x64xf32>
    tpu.vector_store %arg17[%c0_106, %c8_107, %c0_108], %124 {strides = array<i32>} : memref<2x16x64xf32, #tpu.memory_space<vmem>>, vector<2x8x64xf32>,
    %c0_109 = arith.constant 0 : index
    %c0_110 = arith.constant 0 : index
    %c0_111 = arith.constant 0 : index
    %126 = vector.load %arg17[%c0_109, %c0_110, %c0_111] : memref<2x16x64xf32, #tpu.memory_space<vmem>>, vector<2x8x64xf32>
    %127 = vector.shape_cast %126 : vector<2x8x64xf32> to vector<16x64xf32>
    %c0_112 = arith.constant 0 : index
    %c2_113 = arith.constant 2 : index
    %c0_114 = arith.constant 0 : index
    %128 = vector.load %arg17[%c0_112, %c2_113, %c0_114] : memref<2x16x64xf32, #tpu.memory_space<vmem>>, vector<2x8x64xf32>
    %129 = vector.shape_cast %128 : vector<2x8x64xf32> to vector<16x64xf32>
    %c0_115 = arith.constant 0 : index
    %c4_116 = arith.constant 4 : index
    %c0_117 = arith.constant 0 : index
    %130 = vector.load %arg17[%c0_115, %c4_116, %c0_117] : memref<2x16x64xf32, #tpu.memory_space<vmem>>, vector<2x8x64xf32>
    %131 = vector.shape_cast %130 : vector<2x8x64xf32> to vector<16x64xf32>
    %c0_118 = arith.constant 0 : index
    %c6_119 = arith.constant 6 : index
    %c0_120 = arith.constant 0 : index
    %132 = vector.load %arg17[%c0_118, %c6_119, %c0_120] : memref<2x16x64xf32, #tpu.memory_space<vmem>>, vector<2x8x64xf32>
    %133 = vector.shape_cast %132 : vector<2x8x64xf32> to vector<16x64xf32>
    %c0_121 = arith.constant 0 : index
    %c8_122 = arith.constant 8 : index
    %c0_123 = arith.constant 0 : index
    %134 = vector.load %arg17[%c0_121, %c8_122, %c0_123] : memref<2x16x64xf32, #tpu.memory_space<vmem>>, vector<2x8x64xf32>
    %135 = vector.shape_cast %134 : vector<2x8x64xf32> to vector<16x64xf32>
    %136 = tpu.concatenate %127, %129, %131, %133, %135 in 1 : vector<16x64xf32>, vector<16x64xf32>, vector<16x64xf32>, vector<16x64xf32>, vector<16x64xf32> -> vector<16x320xf32>
    %137 = arith.truncf %136 : vector<16x320xf32> to vector<16x320xbf16>
    %cst_124 = arith.constant dense<0.000000e+00> : vector<16x64xf32>
    %138 = tpu.matmul %137, %121, %cst_124 {dimension_numbers = #tpu.dot_dimension_numbers<[1], [0], [0], [1], [0, 0, 1, 1], [], []>} : vector<16x320xbf16>, vector<320x64xbf16>, vector<16x64xf32> -> vector<16x64xf32>
    %139 = vector.broadcast %123 : vector<1x64xf32> to vector<16x64xf32>
    %140 = arith.addf %138, %139 : vector<16x64xf32>
    %cst_125 = arith.constant 0.000000e+00 : f32
    %141 = vector.broadcast %cst_125 : f32 to vector<16x64xf32>
    %142 = arith.maximumf %140, %141 : vector<16x64xf32>
    %143 = arith.addf %142, %96 : vector<16x64xf32>
    %cst_126 = arith.constant 0.000000e+00 : f32
    %144 = vector.broadcast %cst_126 : f32 to vector<16x64xf32>
    %145 = arith.maximumf %143, %144 : vector<16x64xf32>
    %146 = vector.shape_cast %145 : vector<16x64xf32> to vector<2x8x64xf32>
    %147 = vector.extract_strided_slice %146 {offsets = [0, 7, 0], sizes = [2, 1, 64], strides = [1, 1, 1]} : vector<2x8x64xf32> to vector<2x1x64xf32>
    %148 = vector.shape_cast %147 : vector<2x1x64xf32> to vector<2x64xf32>
    %149 = arith.truncf %148 : vector<2x64xf32> to vector<2x64xbf16>
    %c0_127 = arith.constant 0 : index
    %c0_128 = arith.constant 0 : index
    %150 = vector.load %arg14[%c0_127, %c0_128] : memref<64x2xbf16, #tpu.memory_space<vmem>>, vector<64x2xbf16>
    %cst_129 = arith.constant dense<0.000000e+00> : vector<2x2xf32>
    %151 = tpu.matmul %149, %150, %cst_129 {dimension_numbers = #tpu.dot_dimension_numbers<[1], [0], [0], [1], [0, 0, 1, 1], [], []>} : vector<2x64xbf16>, vector<64x2xbf16>, vector<2x2xf32> -> vector<2x2xf32>
    %c0_130 = arith.constant 0 : index
    %c0_131 = arith.constant 0 : index
    %152 = vector.load %arg15[%c0_130, %c0_131] : memref<1x2xf32, #tpu.memory_space<vmem>>, vector<1x2xf32>
    %153 = vector.broadcast %152 : vector<1x2xf32> to vector<2x2xf32>
    %154 = arith.addf %151, %153 : vector<2x2xf32>
    %c0_132 = arith.constant 0 : index
    %c0_133 = arith.constant 0 : index
    %155 = vector.load %arg16[%c0_132, %c0_133] : memref<2x2xf32, #tpu.memory_space<vmem>>, vector<2x2xf32>
    tpu.vector_store %arg16[%c0_132, %c0_133], %154 {strides = array<i32>} : memref<2x2xf32, #tpu.memory_space<vmem>>, vector<2x2xf32>,
    return
  }
  func.func @transform_0(%arg0: i32) -> (i32, i32) {
    %c0_i32 = arith.constant 0 : i32
    %c0_i32_0 = arith.constant 0 : i32
    return %arg0, %c0_i32 : i32, i32
  }
  func.func @transform_1(%arg0: i32) -> (i32, i32) {
    %c0_i32 = arith.constant 0 : i32
    %c0_i32_0 = arith.constant 0 : i32
    %c0_i32_1 = arith.constant 0 : i32
    return %c0_i32, %c0_i32_0 : i32, i32
  }
  func.func @transform_2(%arg0: i32) -> (i32, i32) {
    %c0_i32 = arith.constant 0 : i32
    %c0_i32_0 = arith.constant 0 : i32
    %c0_i32_1 = arith.constant 0 : i32
    return %c0_i32, %c0_i32_0 : i32, i32
  }
  func.func @transform_3(%arg0: i32) -> (i32, i32) {
    %c0_i32 = arith.constant 0 : i32
    %c0_i32_0 = arith.constant 0 : i32
    %c0_i32_1 = arith.constant 0 : i32
    return %c0_i32, %c0_i32_0 : i32, i32
  }
  func.func @transform_4(%arg0: i32) -> (i32, i32) {
    %c0_i32 = arith.constant 0 : i32
    %c0_i32_0 = arith.constant 0 : i32
    %c0_i32_1 = arith.constant 0 : i32
    return %c0_i32, %c0_i32_0 : i32, i32
  }
  func.func @transform_5(%arg0: i32) -> (i32, i32) {
    %c0_i32 = arith.constant 0 : i32
    %c0_i32_0 = arith.constant 0 : i32
    %c0_i32_1 = arith.constant 0 : i32
    return %c0_i32, %c0_i32_0 : i32, i32
  }
  func.func @transform_6(%arg0: i32) -> (i32, i32) {
    %c0_i32 = arith.constant 0 : i32
    %c0_i32_0 = arith.constant 0 : i32
    %c0_i32_1 = arith.constant 0 : i32
    return %c0_i32, %c0_i32_0 : i32, i32
  }
  func.func @transform_7(%arg0: i32) -> (i32, i32) {
    %c0_i32 = arith.constant 0 : i32
    %c0_i32_0 = arith.constant 0 : i32
    %c0_i32_1 = arith.constant 0 : i32
    return %c0_i32, %c0_i32_0 : i32, i32
  }
  func.func @transform_8(%arg0: i32) -> (i32, i32) {
    %c0_i32 = arith.constant 0 : i32
    %c0_i32_0 = arith.constant 0 : i32
    %c0_i32_1 = arith.constant 0 : i32
    return %c0_i32, %c0_i32_0 : i32, i32
  }
  func.func @transform_9(%arg0: i32) -> (i32, i32, i32) {
    %c0_i32 = arith.constant 0 : i32
    %c0_i32_0 = arith.constant 0 : i32
    %c0_i32_1 = arith.constant 0 : i32
    %c0_i32_2 = arith.constant 0 : i32
    return %c0_i32, %c0_i32_0, %c0_i32_1 : i32, i32, i32
  }
  func.func @transform_10(%arg0: i32) -> (i32, i32, i32) {
    %c0_i32 = arith.constant 0 : i32
    %c0_i32_0 = arith.constant 0 : i32
    %c0_i32_1 = arith.constant 0 : i32
    %c0_i32_2 = arith.constant 0 : i32
    return %c0_i32, %c0_i32_0, %c0_i32_1 : i32, i32, i32
  }
  func.func @transform_11(%arg0: i32) -> (i32, i32, i32) {
    %c0_i32 = arith.constant 0 : i32
    %c0_i32_0 = arith.constant 0 : i32
    %c0_i32_1 = arith.constant 0 : i32
    %c0_i32_2 = arith.constant 0 : i32
    return %c0_i32, %c0_i32_0, %c0_i32_1 : i32, i32, i32
  }
  func.func @transform_12(%arg0: i32) -> (i32, i32, i32) {
    %c0_i32 = arith.constant 0 : i32
    %c0_i32_0 = arith.constant 0 : i32
    %c0_i32_1 = arith.constant 0 : i32
    %c0_i32_2 = arith.constant 0 : i32
    return %c0_i32, %c0_i32_0, %c0_i32_1 : i32, i32, i32
  }
  func.func @transform_13(%arg0: i32) -> (i32, i32) {
    %c0_i32 = arith.constant 0 : i32
    %c0_i32_0 = arith.constant 0 : i32
    %c0_i32_1 = arith.constant 0 : i32
    return %c0_i32, %c0_i32_0 : i32, i32
  }
  func.func @transform_14(%arg0: i32) -> (i32, i32) {
    %c0_i32 = arith.constant 0 : i32
    %c0_i32_0 = arith.constant 0 : i32
    %c0_i32_1 = arith.constant 0 : i32
    return %c0_i32, %c0_i32_0 : i32, i32
  }
  func.func @transform_15(%arg0: i32) -> (i32, i32) {
    %c0_i32 = arith.constant 0 : i32
    %c0_i32_0 = arith.constant 0 : i32
    return %arg0, %c0_i32 : i32, i32
  }
}

</mosaic_0001>

<llo_original>
// kernel: t_cnn_tcn_forward.1
$region0: #{t_cnn_tcn_forward.1}
  #allocation0 [shape = 'u32[]', space=smem, size = 0x4, offset = 0x4, fixed_abs, tag = 'smem constant byte address 0x4 - core index']
  #allocation1 [shape = 'u32[144,128]{1,0:T(1,128)}', space=vmem, size = 0x12000, scoped, tag = 'internal scratch']
  #allocation2 [shape = 'f32[2,16,64]{2,1,0:T(8,128)}', space=vmem, size = 0x4000, scoped, tag = 'scratch operand']
  %s0 = inlined_call_operand.vmem [shape: bf16[16,48], index: 0, kind: input, shape index: {}]
  %s1 = inlined_call_operand.vmem [shape: bf16[48,128], index: 1, kind: input, shape index: {}]
  %s2 = inlined_call_operand.vmem [shape: f32[1,32], index: 2, kind: input, shape index: {}]
  %s3 = inlined_call_operand.vmem [shape: bf16[32,64], index: 3, kind: input, shape index: {}]
  %s4 = inlined_call_operand.vmem [shape: f32[1,16], index: 4, kind: input, shape index: {}]
  %s5 = inlined_call_operand.vmem [shape: bf16[16,32], index: 5, kind: input, shape index: {}]
  %s6 = inlined_call_operand.vmem [shape: f32[1,32], index: 6, kind: input, shape index: {}]
  %s7 = inlined_call_operand.vmem [shape: bf16[32,64], index: 7, kind: input, shape index: {}]
  %s8 = inlined_call_operand.vmem [shape: f32[1,64], index: 8, kind: input, shape index: {}]
  %s9 = inlined_call_operand.vmem [shape: bf16[2,320,64], index: 9, kind: input, shape index: {}]
  %s10 = inlined_call_operand.vmem [shape: f32[2,1,64], index: 10, kind: input, shape index: {}]
  %s11 = inlined_call_operand.vmem [shape: bf16[2,320,64], index: 11, kind: input, shape index: {}]
  %s12 = inlined_call_operand.vmem [shape: f32[2,1,64], index: 12, kind: input, shape index: {}]
  %s13 = inlined_call_operand.vmem [shape: bf16[64,2], index: 13, kind: input, shape index: {}]
  %s14 = inlined_call_operand.vmem [shape: f32[1,2], index: 14, kind: input, shape index: {}]
  %s15 = inlined_call_operand.hbm [shape: f32[2,2], index: 15, kind: output, shape index: {}]
  %s16 = sld [smem:[#allocation0]]
  $region70: #{t_cnn_tcn_forward.1} parent=0
    _
  %s18 = ssub.s32 1, %s16
  %s19 = scalar_select 0, %s18, %s16
  $region1: #{t_cnn_tcn_forward.1} parent=0
    #allocation3 [shape = 'u8[1024]{0}', space=vmem, size = 0x400, scoped, tag = 'output window, operand 0, single buffered']
    #allocation4 [shape = 's32[1]{0}', space=sflag, size = 0x4, scoped, tag = 'scoped memory for t_cnn_tcn_forward.1']
    %20 = vsyncpa [#allocation4], 0
    // Predicated region
    $region2: #{t_cnn_tcn_forward.1} parent=1 // pred_check
      _
    $region3: #{t_cnn_tcn_forward.1} parent=1 // pred_check_branch
      %22 = sbr.rel (0) target = $region5
    $region4: #{t_cnn_tcn_forward.1} parent=1 // pred_region
      _
    $region5: #{t_cnn_tcn_forward.1} parent=1 // pred_fallthru
      _
    // Predicated region
    $region6: #{t_cnn_tcn_forward.1} parent=1 // pred_check
      _
    $region7: #{t_cnn_tcn_forward.1} parent=1 // pred_check_branch
      %24 = sbr.rel (0) target = $region9
    $region8: #{t_cnn_tcn_forward.1} parent=1 // pred_region
      _
    $region9: #{t_cnn_tcn_forward.1} parent=1 // pred_fallthru
      _
    // Predicated region
    $region10: #{t_cnn_tcn_forward.1} parent=1 // pred_check
      _
    $region11: #{t_cnn_tcn_forward.1} parent=1 // pred_check_branch
      %26 = sbr.rel (0) target = $region13
    $region12: #{t_cnn_tcn_forward.1} parent=1 // pred_region
      _
    $region13: #{t_cnn_tcn_forward.1} parent=1 // pred_fallthru
      _
    // Predicated region
    $region14: #{t_cnn_tcn_forward.1} parent=1 // pred_check
      _
    $region15: #{t_cnn_tcn_forward.1} parent=1 // pred_check_branch
      %28 = sbr.rel (0) target = $region17
    $region16: #{t_cnn_tcn_forward.1} parent=1 // pred_region
      _
    $region17: #{t_cnn_tcn_forward.1} parent=1 // pred_fallthru
      _
    // Predicated region
    $region18: #{t_cnn_tcn_forward.1} parent=1 // pred_check
      _
    $region19: #{t_cnn_tcn_forward.1} parent=1 // pred_check_branch
      %30 = sbr.rel (0) target = $region21
    $region20: #{t_cnn_tcn_forward.1} parent=1 // pred_region
      _
    $region21: #{t_cnn_tcn_forward.1} parent=1 // pred_fallthru
      _
    // Predicated region
    $region22: #{t_cnn_tcn_forward.1} parent=1 // pred_check
      _
    $region23: #{t_cnn_tcn_forward.1} parent=1 // pred_check_branch
      %32 = sbr.rel (0) target = $region25
    $region24: #{t_cnn_tcn_forward.1} parent=1 // pred_region
      _
    $region25: #{t_cnn_tcn_forward.1} parent=1 // pred_fallthru
      _
    // Predicated region
    $region26: #{t_cnn_tcn_forward.1} parent=1 // pred_check
      _
    $region27: #{t_cnn_tcn_forward.1} parent=1 // pred_check_branch
      %34 = sbr.rel (0) target = $region29
    $region28: #{t_cnn_tcn_forward.1} parent=1 // pred_region
      _
    $region29: #{t_cnn_tcn_forward.1} parent=1 // pred_fallthru
      _
    // Predicated region
    $region30: #{t_cnn_tcn_forward.1} parent=1 // pred_check
      _
    $region31: #{t_cnn_tcn_forward.1} parent=1 // pred_check_branch
      %36 = sbr.rel (0) target = $region33
    $region32: #{t_cnn_tcn_forward.1} parent=1 // pred_region
      _
    $region33: #{t_cnn_tcn_forward.1} parent=1 // pred_fallthru
      _
    // Predicated region
    $region34: #{t_cnn_tcn_forward.1} parent=1 // pred_check
      _
    $region35: #{t_cnn_tcn_forward.1} parent=1 // pred_check_branch
      %38 = sbr.rel (0) target = $region37
    $region36: #{t_cnn_tcn_forward.1} parent=1 // pred_region
      _
    $region37: #{t_cnn_tcn_forward.1} parent=1 // pred_fallthru
      _
    // Predicated region
    $region38: #{t_cnn_tcn_forward.1} parent=1 // pred_check
      _
    $region39: #{t_cnn_tcn_forward.1} parent=1 // pred_check_branch
      %40 = sbr.rel (0) target = $region41
    $region40: #{t_cnn_tcn_forward.1} parent=1 // pred_region
      _
    $region41: #{t_cnn_tcn_forward.1} parent=1 // pred_fallthru
      _
    // Predicated region
    $region42: #{t_cnn_tcn_forward.1} parent=1 // pred_check
      _
    $region43: #{t_cnn_tcn_forward.1} parent=1 // pred_check_branch
      %42 = sbr.rel (0) target = $region45
    $region44: #{t_cnn_tcn_forward.1} parent=1 // pred_region
      _
    $region45: #{t_cnn_tcn_forward.1} parent=1 // pred_fallthru
      _
    // Predicated region
    $region46: #{t_cnn_tcn_forward.1} parent=1 // pred_check
      _
    $region47: #{t_cnn_tcn_forward.1} parent=1 // pred_check_branch
      %44 = sbr.rel (0) target = $region49
    $region48: #{t_cnn_tcn_forward.1} parent=1 // pred_region
      _
    $region49: #{t_cnn_tcn_forward.1} parent=1 // pred_fallthru
      _
    // Predicated region
    $region50: #{t_cnn_tcn_forward.1} parent=1 // pred_check
      _
    $region51: #{t_cnn_tcn_forward.1} parent=1 // pred_check_branch
      %46 = sbr.rel (0) target = $region53
    $region52: #{t_cnn_tcn_forward.1} parent=1 // pred_region
      _
    $region53: #{t_cnn_tcn_forward.1} parent=1 // pred_fallthru
      _
    // Predicated region
    $region54: #{t_cnn_tcn_forward.1} parent=1 // pred_check
      _
    $region55: #{t_cnn_tcn_forward.1} parent=1 // pred_check_branch
      %48 = sbr.rel (0) target = $region57
    $region56: #{t_cnn_tcn_forward.1} parent=1 // pred_region
      _
    $region57: #{t_cnn_tcn_forward.1} parent=1 // pred_fallthru
      _
    // Predicated region
    $region58: #{t_cnn_tcn_forward.1} parent=1 // pred_check
      _
    $region59: #{t_cnn_tcn_forward.1} parent=1 // pred_check_branch
      %50 = sbr.rel (0) target = $region61
    $region60: #{t_cnn_tcn_forward.1} parent=1 // pred_region
      _
    $region61: #{t_cnn_tcn_forward.1} parent=1 // pred_fallthru
      _
    %v52 = vld [vmem:[%s0] sm:$0xf]
    %v53 = vld [vmem:[%s0 + $0x4] sm:$0xf]
    %v54 = vld [vmem:[%s1] sm:$0xf]
    %v55 = vld [vmem:[%s1 + $0x4] sm:$0xf]
    %v56 = vld [vmem:[%s1 + $0x8] sm:$0xf]
    %v57 = vld [vmem:[%s1 + $0xc] sm:$0xf]
    %v58 = vld [vmem:[%s1 + $0x10] sm:$0xf]
    %v59 = vld [vmem:[%s1 + $0x14] sm:$0xf]
    %v62 = vunpack.c.l.b16 %v52
    %v63 = vunpack.c.l.b16 %v53
    %v64 = vpack.c.b16 %v63, %v62
    %v71 = vunpack.c.l.b16 %v54
    %v72 = vunpack.c.l.b16 %v55
    %v73 = vunpack.c.l.b16 %v56
    %v74 = vunpack.c.l.b16 %v57
    %v75 = vunpack.c.l.b16 %v58
    %v76 = vunpack.c.l.b16 %v59
    %v77 = vpack.c.b16 %v72, %v71
    %v78 = vpack.c.b16 %v74, %v73
    %v79 = vpack.c.b16 %v76, %v75
    %vm83 = vcmask 392192
    %v85 = vsel %vm83, %v64, 0
    %87 = vmatprep.subr.bf16.mxu0 0
    %88 = vmatpush1.bf16.msra.mxu0 %v77
    %89 = vmatprep.subr.bf16.mxu0 0
    %90 = vmatpush1.bf16.msra.mxu0 %v78
    %91 = vmatprep.subr.bf16.mxu0 0
    %92 = vmatpush1.bf16.msra.mxu0 %v79
    %93 = vmatprep.subr.bf16.mxu0 0
    %94 = vmatpush1.bf16.msra.mxu0 0
    %95 = vmatprep.subr.bf16.mxu0 0
    %96 = vmatpush1.bf16.msra.mxu0 0
    %97 = vmatprep.subr.bf16.mxu0 0
    %98 = vmatpush1.bf16.msra.mxu0 0
    %99 = vmatprep.subr.bf16.mxu0 0
    %100 = vmatpush1.bf16.msra.mxu0 0
    %101 = vmatprep.subr.bf16.mxu0 0
    %102 = vmatpush1.bf16.msra.mxu0 0
    %103 = vmatprep.subr.bf16.mxu0 0
    %104 = vmatpush1.bf16.msra.mxu0 0
    %105 = vmatprep.subr.bf16.mxu0 0
    %106 = vmatpush1.bf16.msra.mxu0 0
    %107 = vmatprep.subr.bf16.mxu0 0
    %108 = vmatpush1.bf16.msra.mxu0 0
    %109 = vmatprep.subr.bf16.mxu0 0
    %110 = vmatpush1.bf16.msra.mxu0 0
    %111 = vmatprep.subr.bf16.mxu0 0
    %112 = vmatpush1.bf16.msra.mxu0 0
    %113 = vmatprep.subr.bf16.mxu0 0
    %114 = vmatpush1.bf16.msra.mxu0 0
    %115 = vmatprep.subr.bf16.mxu0 0
    %116 = vmatpush1.bf16.msra.mxu0 0
    %117 = vmatprep.subr.bf16.mxu0 0
    %118 = vmatpush1.bf16.msra.mxu0 0
    %119 = vmatprep.mubr.bf16.mxu0 0
    %120 = vmatmul.mubr.bf16.gmra.mrb[0].mxu0 %v85
    %v121 = vpop.f32.mrb[0].mxu0
    %v122 = vadd.f32 0.0, %v121
    %v123 = vpop.f32.mrb[0].mxu0
    %v124 = vpop.f32.mrb[0].mxu0
    %v125 = vadd.f32 0.0, %v124
    %v126 = vpop.f32.mrb[0].mxu0
    %127 = vdwg.mxu0
    %130 = vrot.lane.b32.xlu0 %v122, 96
    %v131 = vpop.permute.xlu0 %130
    %132 = vrot.lane.b32.xlu0 %v125, 96
    %v133 = vpop.permute.xlu0 %132
    %v136 = vmax.f32 %v122, %v131
    %v137 = vmax.f32 %v125, %v133
    %138 = vrot.lane.b32.xlu0 %v122, 64
    %v139 = vpop.permute.xlu0 %138
    %140 = vrot.lane.b32.xlu0 %v125, 64
    %v141 = vpop.permute.xlu0 %140
    %v144 = vmax.f32 %v136, %v139
    %v145 = vmax.f32 %v137, %v141
    %146 = vrot.lane.b32.xlu0 %v122, 32
    %v147 = vpop.permute.xlu0 %146
    %148 = vrot.lane.b32.xlu0 %v125, 32
    %v149 = vpop.permute.xlu0 %148
    %v152 = vmax.f32 %v144, %v147
    %v153 = vmax.f32 %v145, %v149
    %v154 = vld [vmem:[%s2] sm:$0x1]
    %v156 = vlaneseq
    %v157 = vshrl.u32 %v156, 7
    %v158 = vsub.s32 0, %v157
    %v159 = vrot.slane %v154, %v158
    %v161 = vadd.f32 %v152, %v159
    %v162 = vadd.f32 %v153, %v159
    %v163 = vmax.f32 %v161, 0.0
    %v164 = vmax.f32 %v162, 0.0
    %v165 = vpack.c.bf16 %v164, %v163
    %v166 = vld [vmem:[%s3] sm:$0xf]
    %v167 = vld [vmem:[%s3 + $0x4] sm:$0xf]
    %v168 = vld [vmem:[%s3 + $0x8] sm:$0xf]
    %v169 = vld [vmem:[%s3 + $0xc] sm:$0xf]
    %v174 = vunpack.c.l.b16 %v166
    %v175 = vunpack.c.l.b16 %v167
    %v176 = vunpack.c.l.b16 %v168
    %v177 = vunpack.c.l.b16 %v169
    %v178 = vpack.c.b16 %v175, %v174
    %v179 = vpack.c.b16 %v177, %v176
    %vm182 = vcmask 261120
    %v184 = vsel %vm182, %v165, 0
    %186 = vmatprep.subr.bf16.mxu0 0
    %187 = vmatpush1.bf16.msra.mxu0 %v178
    %188 = vmatprep.subr.bf16.mxu0 0
    %189 = vmatpush1.bf16.msra.mxu0 %v179
    %190 = vmatprep.subr.bf16.mxu0 0
    %191 = vmatpush1.bf16.msra.mxu0 0
    %192 = vmatprep.subr.bf16.mxu0 0
    %193 = vmatpush1.bf16.msra.mxu0 0
    %194 = vmatprep.subr.bf16.mxu0 0
    %195 = vmatpush1.bf16.msra.mxu0 0
    %196 = vmatprep.subr.bf16.mxu0 0
    %197 = vmatpush1.bf16.msra.mxu0 0
    %198 = vmatprep.subr.bf16.mxu0 0
    %199 = vmatpush1.bf16.msra.mxu0 0
    %200 = vmatprep.subr.bf16.mxu0 0
    %201 = vmatpush1.bf16.msra.mxu0 0
    %202 = vmatprep.subr.bf16.mxu0 0
    %203 = vmatpush1.bf16.msra.mxu0 0
    %204 = vmatprep.subr.bf16.mxu0 0
    %205 = vmatpush1.bf16.msra.mxu0 0
    %206 = vmatprep.subr.bf16.mxu0 0
    %207 = vmatpush1.bf16.msra.mxu0 0
    %208 = vmatprep.subr.bf16.mxu0 0
    %209 = vmatpush1.bf16.msra.mxu0 0
    %210 = vmatprep.subr.bf16.mxu0 0
    %211 = vmatpush1.bf16.msra.mxu0 0
    %212 = vmatprep.subr.bf16.mxu0 0
    %213 = vmatpush1.bf16.msra.mxu0 0
    %214 = vmatprep.subr.bf16.mxu0 0
    %215 = vmatpush1.bf16.msra.mxu0 0
    %216 = vmatprep.subr.bf16.mxu0 0
    %217 = vmatpush1.bf16.msra.mxu0 0
    %218 = vmatprep.mubr.bf16.mxu0 0
    %219 = vmatmul.mubr.bf16.gmra.mrb[0].mxu0 %v184
    %v220 = vpop.f32.mrb[0].mxu0
    %v221 = vadd.f32 0.0, %v220
    %v222 = vpop.f32.mrb[0].mxu0
    %v223 = vpop.f32.mrb[0].mxu0
    %v224 = vadd.f32 0.0, %v223
    %v225 = vpop.f32.mrb[0].mxu0
    %226 = vdwg.mxu0
    %229 = vrot.lane.b32.xlu0 %v221, 112
    %v230 = vpop.permute.xlu0 %229
    %231 = vrot.lane.b32.xlu0 %v224, 112
    %v232 = vpop.permute.xlu0 %231
    %v235 = vmax.f32 %v221, %v230
    %v236 = vmax.f32 %v224, %v232
    %237 = vrot.lane.b32.xlu0 %v221, 96
    %v238 = vpop.permute.xlu0 %237
    %239 = vrot.lane.b32.xlu0 %v224, 96
    %v240 = vpop.permute.xlu0 %239
    %v243 = vmax.f32 %v235, %v238
    %v244 = vmax.f32 %v236, %v240
    %245 = vrot.lane.b32.xlu0 %v221, 80
    %v246 = vpop.permute.xlu0 %245
    %247 = vrot.lane.b32.xlu0 %v224, 80
    %v248 = vpop.permute.xlu0 %247
    %v251 = vmax.f32 %v243, %v246
    %v252 = vmax.f32 %v244, %v248
    %v253 = vld [vmem:[%s4] sm:$0x1]
    %v255 = vlaneseq
    %v256 = vshrl.u32 %v255, 7
    %v257 = vsub.s32 0, %v256
    %v258 = vrot.slane %v253, %v257
    %v260 = vadd.f32 %v251, %v258
    %v261 = vadd.f32 %v252, %v258
    %v262 = vmax.f32 %v260, 0.0
    %v263 = vmax.f32 %v261, 0.0
    %v264 = vpack.c.bf16 %v263, %v262
    %v265 = vld [vmem:[%s5] sm:$0xf]
    %v266 = vld [vmem:[%s5 + $0x4] sm:$0xf]
    %v267 = vld [vmem:[%s6] sm:$0x1]
    %v269 = vlaneseq
    %v270 = vshrl.u32 %v269, 7
    %v271 = vsub.s32 0, %v270
    %v272 = vrot.slane %v267, %v271
    %v276 = vunpack.c.l.b16 %v265
    %v277 = vunpack.c.l.b16 %v266
    %v278 = vpack.c.b16 %v277, %v276
    %vm280 = vcmask 130048
    %v282 = vsel %vm280, %v264, 0
    %284 = vmatprep.subr.bf16.mxu0 0
    %285 = vmatpush1.bf16.msra.mxu0 %v278
    %286 = vmatprep.subr.bf16.mxu0 0
    %287 = vmatpush1.bf16.msra.mxu0 0
    %288 = vmatprep.subr.bf16.mxu0 0
    %289 = vmatpush1.bf16.msra.mxu0 0
    %290 = vmatprep.subr.bf16.mxu0 0
    %291 = vmatpush1.bf16.msra.mxu0 0
    %292 = vmatprep.subr.bf16.mxu0 0
    %293 = vmatpush1.bf16.msra.mxu0 0
    %294 = vmatprep.subr.bf16.mxu0 0
    %295 = vmatpush1.bf16.msra.mxu0 0
    %296 = vmatprep.subr.bf16.mxu0 0
    %297 = vmatpush1.bf16.msra.mxu0 0
    %298 = vmatprep.subr.bf16.mxu0 0
    %299 = vmatpush1.bf16.msra.mxu0 0
    %300 = vmatprep.subr.bf16.mxu0 0
    %301 = vmatpush1.bf16.msra.mxu0 0
    %302 = vmatprep.subr.bf16.mxu0 0
    %303 = vmatpush1.bf16.msra.mxu0 0
    %304 = vmatprep.subr.bf16.mxu0 0
    %305 = vmatpush1.bf16.msra.mxu0 0
    %306 = vmatprep.subr.bf16.mxu0 0
    %307 = vmatpush1.bf16.msra.mxu0 0
    %308 = vmatprep.subr.bf16.mxu0 0
    %309 = vmatpush1.bf16.msra.mxu0 0
    %310 = vmatprep.subr.bf16.mxu0 0
    %311 = vmatpush1.bf16.msra.mxu0 0
    %312 = vmatprep.subr.bf16.mxu0 0
    %313 = vmatpush1.bf16.msra.mxu0 0
    %314 = vmatprep.subr.bf16.mxu0 0
    %315 = vmatpush1.bf16.msra.mxu0 0
    %316 = vmatprep.mubr.bf16.mxu0 0
    %317 = vmatmul.mubr.bf16.gmra.mrb[0].mxu0 %v282
    %v318 = vpop.f32.mrb[0].mxu0
    %v319 = vadd.f32 %v272, %v318
    %v320 = vpop.f32.mrb[0].mxu0
    %v321 = vpop.f32.mrb[0].mxu0
    %v322 = vadd.f32 %v272, %v321
    %v323 = vpop.f32.mrb[0].mxu0
    %324 = vdwg.mxu0
    %v325 = vmax.f32 %v319, 0.0
    %v326 = vmax.f32 %v322, 0.0
    %v327 = vpack.c.bf16 %v326, %v325
    %v328 = vld [vmem:[%s7] sm:$0xf]
    %v329 = vld [vmem:[%s7 + $0x4] sm:$0xf]
    %v330 = vld [vmem:[%s7 + $0x8] sm:$0xf]
    %v331 = vld [vmem:[%s7 + $0xc] sm:$0xf]
    %v332 = vld [vmem:[%s8] sm:$0x1]
    %v334 = vlaneseq
    %v335 = vshrl.u32 %v334, 7
    %v336 = vsub.s32 0, %v335
    %v337 = vrot.slane %v332, %v336
    %v343 = vunpack.c.l.b16 %v328
    %v344 = vunpack.c.l.b16 %v329
    %v345 = vunpack.c.l.b16 %v330
    %v346 = vunpack.c.l.b16 %v331
    %v347 = vpack.c.b16 %v344, %v343
    %v348 = vpack.c.b16 %v346, %v345
    %v352 = vsel %vm182, %v327, 0
    %354 = vmatprep.subr.bf16.mxu0 0
    %355 = vmatpush1.bf16.msra.mxu0 %v347
    %356 = vmatprep.subr.bf16.mxu0 0
    %357 = vmatpush1.bf16.msra.mxu0 %v348
    %358 = vmatprep.subr.bf16.mxu0 0
    %359 = vmatpush1.bf16.msra.mxu0 0
    %360 = vmatprep.subr.bf16.mxu0 0
    %361 = vmatpush1.bf16.msra.mxu0 0
    %362 = vmatprep.subr.bf16.mxu0 0
    %363 = vmatpush1.bf16.msra.mxu0 0
    %364 = vmatprep.subr.bf16.mxu0 0
    %365 = vmatpush1.bf16.msra.mxu0 0
    %366 = vmatprep.subr.bf16.mxu0 0
    %367 = vmatpush1.bf16.msra.mxu0 0
    %368 = vmatprep.subr.bf16.mxu0 0
    %369 = vmatpush1.bf16.msra.mxu0 0
    %370 = vmatprep.subr.bf16.mxu0 0
    %371 = vmatpush1.bf16.msra.mxu0 0
    %372 = vmatprep.subr.bf16.mxu0 0
    %373 = vmatpush1.bf16.msra.mxu0 0
    %374 = vmatprep.subr.bf16.mxu0 0
    %375 = vmatpush1.bf16.msra.mxu0 0
    %376 = vmatprep.subr.bf16.mxu0 0
    %377 = vmatpush1.bf16.msra.mxu0 0
    %378 = vmatprep.subr.bf16.mxu0 0
    %379 = vmatpush1.bf16.msra.mxu0 0
    %380 = vmatprep.subr.bf16.mxu0 0
    %381 = vmatpush1.bf16.msra.mxu0 0
    %382 = vmatprep.subr.bf16.mxu0 0
    %383 = vmatpush1.bf16.msra.mxu0 0
    %384 = vmatprep.subr.bf16.mxu0 0
    %385 = vmatpush1.bf16.msra.mxu0 0
    %386 = vmatprep.mubr.bf16.mxu0 0
    %387 = vmatmul.mubr.bf16.gmra.mrb[0].mxu0 %v352
    %v388 = vpop.f32.mrb[0].mxu0
    %v389 = vadd.f32 %v337, %v388
    %v390 = vpop.f32.mrb[0].mxu0
    %v391 = vpop.f32.mrb[0].mxu0
    %v392 = vadd.f32 %v337, %v391
    %v393 = vpop.f32.mrb[0].mxu0
    %394 = vdwg.mxu0
    %v395 = vmax.f32 %v389, 0.0
    %v396 = vmax.f32 %v392, 0.0
    %vm397 = vcmask 523264
    %398 = vst.msk [vmem:[#allocation2] sm:$0xff] %vm397, 0.0
    %399 = vst.msk [vmem:[#allocation2 + $0x10] sm:$0xff] %vm397, 0.0
    %v400 = vld [vmem:[%s9] sm:$0xf]
    %v401 = vld [vmem:[%s9 + $0x4] sm:$0xf]
    %v402 = vld [vmem:[%s9 + $0x8] sm:$0xf]
    %v403 = vld [vmem:[%s9 + $0xc] sm:$0xf]
    %v404 = vld [vmem:[%s9 + $0x10] sm:$0xf]
    %v405 = vld [vmem:[%s9 + $0x14] sm:$0xf]
    %v406 = vld [vmem:[%s9 + $0x18] sm:$0xf]
    %v407 = vld [vmem:[%s9 + $0x1c] sm:$0xf]
    %v408 = vld [vmem:[%s9 + $0x20] sm:$0xf]
    %v409 = vld [vmem:[%s9 + $0x24] sm:$0xf]
    %v410 = vld [vmem:[%s9 + $0x28] sm:$0xf]
    %v411 = vld [vmem:[%s9 + $0x2c] sm:$0xf]
    %v412 = vld [vmem:[%s9 + $0x30] sm:$0xf]
    %v413 = vld [vmem:[%s9 + $0x34] sm:$0xf]
    %v414 = vld [vmem:[%s9 + $0x38] sm:$0xf]
    %v415 = vld [vmem:[%s9 + $0x3c] sm:$0xf]
    %v416 = vld [vmem:[%s9 + $0x40] sm:$0xf]
    %v417 = vld [vmem:[%s9 + $0x44] sm:$0xf]
    %v418 = vld [vmem:[%s9 + $0x48] sm:$0xf]
    %v419 = vld [vmem:[%s9 + $0x4c] sm:$0xf]
    %v420 = vld [vmem:[%s9 + $0x50] sm:$0xf]
    %v421 = vld [vmem:[%s9 + $0x54] sm:$0xf]
    %v422 = vld [vmem:[%s9 + $0x58] sm:$0xf]
    %v423 = vld [vmem:[%s9 + $0x5c] sm:$0xf]
    %v424 = vld [vmem:[%s9 + $0x60] sm:$0xf]
    %v425 = vld [vmem:[%s9 + $0x64] sm:$0xf]
    %v426 = vld [vmem:[%s9 + $0x68] sm:$0xf]
    %v427 = vld [vmem:[%s9 + $0x6c] sm:$0xf]
    %v428 = vld [vmem:[%s9 + $0x70] sm:$0xf]
    %v429 = vld [vmem:[%s9 + $0x74] sm:$0xf]
    %v430 = vld [vmem:[%s9 + $0x78] sm:$0xf]
    %v431 = vld [vmem:[%s9 + $0x7c] sm:$0xf]
    %v432 = vld [vmem:[%s9 + $0x80] sm:$0xf]
    %v433 = vld [vmem:[%s9 + $0x84] sm:$0xf]
    %v434 = vld [vmem:[%s9 + $0x88] sm:$0xf]
    %v435 = vld [vmem:[%s9 + $0x8c] sm:$0xf]
    %v436 = vld [vmem:[%s9 + $0x90] sm:$0xf]
    %v437 = vld [vmem:[%s9 + $0x94] sm:$0xf]
    %v438 = vld [vmem:[%s9 + $0x98] sm:$0xf]
    %v439 = vld [vmem:[%s9 + $0x9c] sm:$0xf]
    %v440 = vld [vmem:[%s10] sm:$0x1]
    %441 = vst.msk [vmem:[#allocation2 + $0x8] sm:$0xff] %vm397, %v395
    %442 = vst.msk [vmem:[#allocation2 + $0x18] sm:$0xff] %vm397, %v396
    %v443 = vld [vmem:[#allocation2 + $0x4] sm:$0xff]
    %v444 = vld [vmem:[#allocation2 + $0x14] sm:$0xff]
    %v445 = vld [vmem:[#allocation2 + $0x5] sm:$0xff]
    %v446 = vld [vmem:[#allocation2 + $0x15] sm:$0xff]
    %v447 = vld [vmem:[#allocation2 + $0x6] sm:$0xff]
    %v448 = vld [vmem:[#allocation2 + $0x16] sm:$0xff]
    %v449 = vld [vmem:[#allocation2 + $0x7] sm:$0xff]
    %v450 = vld [vmem:[#allocation2 + $0x17] sm:$0xff]
    %v451 = vld [vmem:[#allocation2 + $0x8] sm:$0xff]
    %v452 = vld [vmem:[#allocation2 + $0x18] sm:$0xff]
    %455 = vrot.lane.b32.xlu0 %v445, 64
    %v456 = vpop.permute.xlu0 %455
    %457 = vrot.lane.b32.xlu0 %v446, 64
    %v458 = vpop.permute.xlu0 %457
    %463 = vrot.lane.b32.xlu0 %v449, 64
    %v464 = vpop.permute.xlu0 %463
    %465 = vrot.lane.b32.xlu0 %v450, 64
    %v466 = vpop.permute.xlu0 %465
    %v469 = vsel %vm397, %v443, %v456
    %v470 = vsel %vm397, %v444, %v458
    %v471 = vsel %vm397, %v447, %v464
    %v472 = vsel %vm397, %v448, %v466
    %v473 = vpack.c.bf16 %v470, %v469
    %v474 = vpack.c.bf16 %v472, %v471
    %v475 = vpack.c.bf16 %v452, %v451
    %v477 = vlaneseq
    %v478 = vshrl.u32 %v477, 7
    %v479 = vsub.s32 0, %v478
    %v480 = vrot.slane %v440, %v479
    %v522 = vunpack.c.l.b16 %v400
    %v523 = vunpack.c.l.b16 %v401
    %v524 = vunpack.c.l.b16 %v402
    %v525 = vunpack.c.l.b16 %v403
    %v526 = vunpack.c.l.b16 %v404
    %v527 = vunpack.c.l.b16 %v405
    %v528 = vunpack.c.l.b16 %v406
    %v529 = vunpack.c.l.b16 %v407
    %v530 = vunpack.c.l.b16 %v408
    %v531 = vunpack.c.l.b16 %v409
    %v532 = vunpack.c.l.b16 %v410
    %v533 = vunpack.c.l.b16 %v411
    %v534 = vunpack.c.l.b16 %v412
    %v535 = vunpack.c.l.b16 %v413
    %v536 = vunpack.c.l.b16 %v414
    %v537 = vunpack.c.l.b16 %v415
    %v538 = vunpack.c.l.b16 %v416
    %v539 = vunpack.c.l.b16 %v417
    %v540 = vunpack.c.l.b16 %v418
    %v541 = vunpack.c.l.b16 %v419
    %v542 = vunpack.c.l.b16 %v420
    %v543 = vunpack.c.l.b16 %v421
    %v544 = vunpack.c.l.b16 %v422
    %v545 = vunpack.c.l.b16 %v423
    %v546 = vunpack.c.l.b16 %v424
    %v547 = vunpack.c.l.b16 %v425
    %v548 = vunpack.c.l.b16 %v426
    %v549 = vunpack.c.l.b16 %v427
    %v550 = vunpack.c.l.b16 %v428
    %v551 = vunpack.c.l.b16 %v429
    %v552 = vunpack.c.l.b16 %v430
    %v553 = vunpack.c.l.b16 %v431
    %v554 = vunpack.c.l.b16 %v432
    %v555 = vunpack.c.l.b16 %v433
    %v556 = vunpack.c.l.b16 %v434
    %v557 = vunpack.c.l.b16 %v435
    %v558 = vunpack.c.l.b16 %v436
    %v559 = vunpack.c.l.b16 %v437
    %v560 = vunpack.c.l.b16 %v438
    %v561 = vunpack.c.l.b16 %v439
    %v562 = vpack.c.b16 %v523, %v522
    %v563 = vpack.c.b16 %v525, %v524
    %v564 = vpack.c.b16 %v527, %v526
    %v565 = vpack.c.b16 %v529, %v528
    %v566 = vpack.c.b16 %v531, %v530
    %v567 = vpack.c.b16 %v533, %v532
    %v568 = vpack.c.b16 %v535, %v534
    %v569 = vpack.c.b16 %v537, %v536
    %v570 = vpack.c.b16 %v539, %v538
    %v571 = vpack.c.b16 %v541, %v540
    %v572 = vpack.c.b16 %v543, %v542
    %v573 = vpack.c.b16 %v545, %v544
    %v574 = vpack.c.b16 %v547, %v546
    %v575 = vpack.c.b16 %v549, %v548
    %v576 = vpack.c.b16 %v551, %v550
    %v577 = vpack.c.b16 %v553, %v552
    %v578 = vpack.c.b16 %v555, %v554
    %v579 = vpack.c.b16 %v557, %v556
    %v580 = vpack.c.b16 %v559, %v558
    %v581 = vpack.c.b16 %v561, %v560
    %v603 = vsel %vm397, %v475, 0
    %605 = vmatprep.subr.bf16.mxu0 0
    %606 = vmatpush1.bf16.msra.mxu0 %v562
    %607 = vmatprep.subr.bf16.mxu0 0
    %608 = vmatpush1.bf16.msra.mxu0 %v563
    %609 = vmatprep.subr.bf16.mxu0 0
    %610 = vmatpush1.bf16.msra.mxu0 %v564
    %611 = vmatprep.subr.bf16.mxu0 0
    %612 = vmatpush1.bf16.msra.mxu0 %v565
    %613 = vmatprep.subr.bf16.mxu0 0
    %614 = vmatpush1.bf16.msra.mxu0 %v566
    %615 = vmatprep.subr.bf16.mxu0 0
    %616 = vmatpush1.bf16.msra.mxu0 %v567
    %617 = vmatprep.subr.bf16.mxu0 0
    %618 = vmatpush1.bf16.msra.mxu0 %v568
    %619 = vmatprep.subr.bf16.mxu0 0
    %620 = vmatpush1.bf16.msra.mxu0 %v569
    %621 = vmatprep.subr.bf16.mxu0 0
    %622 = vmatpush1.bf16.msra.mxu0 %v570
    %623 = vmatprep.subr.bf16.mxu0 0
    %624 = vmatpush1.bf16.msra.mxu0 %v571
    %625 = vmatprep.subr.bf16.mxu0 0
    %626 = vmatpush1.bf16.msra.mxu0 %v572
    %627 = vmatprep.subr.bf16.mxu0 0
    %628 = vmatpush1.bf16.msra.mxu0 %v573
    %629 = vmatprep.subr.bf16.mxu0 0
    %630 = vmatpush1.bf16.msra.mxu0 %v574
    %631 = vmatprep.subr.bf16.mxu0 0
    %632 = vmatpush1.bf16.msra.mxu0 %v575
    %633 = vmatprep.subr.bf16.mxu0 0
    %634 = vmatpush1.bf16.msra.mxu0 %v576
    %635 = vmatprep.subr.bf16.mxu0 0
    %636 = vmatpush1.bf16.msra.mxu0 %v577
    %637 = vmatprep.mubr.bf16.mxu0 %v474
    %638 = vmatmul.mubr.bf16.gmra.mrb[0].mxu0 %v473
    %v639 = vpop.f32.mrb[0].mxu0
    %v640 = vadd.f32 %v480, %v639
    %v641 = vpop.f32.mrb[0].mxu0
    %v642 = vpop.f32.mrb[0].mxu0
    %v643 = vadd.f32 %v480, %v642
    %v644 = vpop.f32.mrb[0].mxu0
    %645 = vdwg.mxu0
    %646 = vmatprep.subr.bf16.mxu0 0
    %647 = vmatpush1.bf16.msra.mxu0 %v578
    %648 = vmatprep.subr.bf16.mxu0 0
    %649 = vmatpush1.bf16.msra.mxu0 %v579
    %650 = vmatprep.subr.bf16.mxu0 0
    %651 = vmatpush1.bf16.msra.mxu0 %v580
    %652 = vmatprep.subr.bf16.mxu0 0
    %653 = vmatpush1.bf16.msra.mxu0 %v581
    %654 = vmatprep.subr.bf16.mxu0 0
    %655 = vmatpush1.bf16.msra.mxu0 0
    %656 = vmatprep.subr.bf16.mxu0 0
    %657 = vmatpush1.bf16.msra.mxu0 0
    %658 = vmatprep.subr.bf16.mxu0 0
    %659 = vmatpush1.bf16.msra.mxu0 0
    %660 = vmatprep.subr.bf16.mxu0 0
    %661 = vmatpush1.bf16.msra.mxu0 0
    %662 = vmatprep.subr.bf16.mxu0 0
    %663 = vmatpush1.bf16.msra.mxu0 0
    %664 = vmatprep.subr.bf16.mxu0 0
    %665 = vmatpush1.bf16.msra.mxu0 0
    %666 = vmatprep.subr.bf16.mxu0 0
    %667 = vmatpush1.bf16.msra.mxu0 0
    %668 = vmatprep.subr.bf16.mxu0 0
    %669 = vmatpush1.bf16.msra.mxu0 0
    %670 = vmatprep.subr.bf16.mxu0 0
    %671 = vmatpush1.bf16.msra.mxu0 0
    %672 = vmatprep.subr.bf16.mxu0 0
    %673 = vmatpush1.bf16.msra.mxu0 0
    %674 = vmatprep.subr.bf16.mxu0 0
    %675 = vmatpush1.bf16.msra.mxu0 0
    %676 = vmatprep.subr.bf16.mxu0 0
    %677 = vmatpush1.bf16.msra.mxu0 0
    %678 = vmatprep.mubr.bf16.mxu0 0
    %679 = vmatmul.mubr.bf16.gmra.mrb[0].mxu0 %v603
    %v680 = vpop.f32.mrb[0].mxu0
    %v681 = vadd.f32 %v640, %v680
    %v682 = vpop.f32.mrb[0].mxu0
    %v683 = vpop.f32.mrb[0].mxu0
    %v684 = vadd.f32 %v643, %v683
    %v685 = vpop.f32.mrb[0].mxu0
    %686 = vdwg.mxu0
    %v687 = vmax.f32 %v681, 0.0
    %v688 = vmax.f32 %v684, 0.0
    %v689 = vld [vmem:[%s11] sm:$0xf]
    %v690 = vld [vmem:[%s11 + $0x4] sm:$0xf]
    %v691 = vld [vmem:[%s11 + $0x8] sm:$0xf]
    %v692 = vld [vmem:[%s11 + $0xc] sm:$0xf]
    %v693 = vld [vmem:[%s11 + $0x10] sm:$0xf]
    %v694 = vld [vmem:[%s11 + $0x14] sm:$0xf]
    %v695 = vld [vmem:[%s11 + $0x18] sm:$0xf]
    %v696 = vld [vmem:[%s11 + $0x1c] sm:$0xf]
    %v697 = vld [vmem:[%s11 + $0x20] sm:$0xf]
    %v698 = vld [vmem:[%s11 + $0x24] sm:$0xf]
    %v699 = vld [vmem:[%s11 + $0x28] sm:$0xf]
    %v700 = vld [vmem:[%s11 + $0x2c] sm:$0xf]
    %v701 = vld [vmem:[%s11 + $0x30] sm:$0xf]
    %v702 = vld [vmem:[%s11 + $0x34] sm:$0xf]
    %v703 = vld [vmem:[%s11 + $0x38] sm:$0xf]
    %v704 = vld [vmem:[%s11 + $0x3c] sm:$0xf]
    %v705 = vld [vmem:[%s11 + $0x40] sm:$0xf]
    %v706 = vld [vmem:[%s11 + $0x44] sm:$0xf]
    %v707 = vld [vmem:[%s11 + $0x48] sm:$0xf]
    %v708 = vld [vmem:[%s11 + $0x4c] sm:$0xf]
    %v709 = vld [vmem:[%s11 + $0x50] sm:$0xf]
    %v710 = vld [vmem:[%s11 + $0x54] sm:$0xf]
    %v711 = vld [vmem:[%s11 + $0x58] sm:$0xf]
    %v712 = vld [vmem:[%s11 + $0x5c] sm:$0xf]
    %v713 = vld [vmem:[%s11 + $0x60] sm:$0xf]
    %v714 = vld [vmem:[%s11 + $0x64] sm:$0xf]
    %v715 = vld [vmem:[%s11 + $0x68] sm:$0xf]
    %v716 = vld [vmem:[%s11 + $0x6c] sm:$0xf]
    %v717 = vld [vmem:[%s11 + $0x70] sm:$0xf]
    %v718 = vld [vmem:[%s11 + $0x74] sm:$0xf]
    %v719 = vld [vmem:[%s11 + $0x78] sm:$0xf]
    %v720 = vld [vmem:[%s11 + $0x7c] sm:$0xf]
    %v721 = vld [vmem:[%s11 + $0x80] sm:$0xf]
    %v722 = vld [vmem:[%s11 + $0x84] sm:$0xf]
    %v723 = vld [vmem:[%s11 + $0x88] sm:$0xf]
    %v724 = vld [vmem:[%s11 + $0x8c] sm:$0xf]
    %v725 = vld [vmem:[%s11 + $0x90] sm:$0xf]
    %v726 = vld [vmem:[%s11 + $0x94] sm:$0xf]
    %v727 = vld [vmem:[%s11 + $0x98] sm:$0xf]
    %v728 = vld [vmem:[%s11 + $0x9c] sm:$0xf]
    %v729 = vld [vmem:[%s12] sm:$0x1]
    %730 = vst.msk [vmem:[#allocation2 + $0x8] sm:$0xff] %vm397, %v687
    %731 = vst.msk [vmem:[#allocation2 + $0x18] sm:$0xff] %vm397, %v688
    %v732 = vld [vmem:[#allocation2 + $0x4] sm:$0xff]
    %v733 = vld [vmem:[#allocation2 + $0x14] sm:$0xff]
    %v734 = vld [vmem:[#allocation2 + $0x5] sm:$0xff]
    %v735 = vld [vmem:[#allocation2 + $0x15] sm:$0xff]
    %v736 = vld [vmem:[#allocation2 + $0x6] sm:$0xff]
    %v737 = vld [vmem:[#allocation2 + $0x16] sm:$0xff]
    %v738 = vld [vmem:[#allocation2 + $0x7] sm:$0xff]
    %v739 = vld [vmem:[#allocation2 + $0x17] sm:$0xff]
    %v740 = vld [vmem:[#allocation2 + $0x8] sm:$0xff]
    %v741 = vld [vmem:[#allocation2 + $0x18] sm:$0xff]
    %744 = vrot.lane.b32.xlu0 %v734, 64
    %v745 = vpop.permute.xlu0 %744
    %746 = vrot.lane.b32.xlu0 %v735, 64
    %v747 = vpop.permute.xlu0 %746
    %752 = vrot.lane.b32.xlu0 %v738, 64
    %v753 = vpop.permute.xlu0 %752
    %754 = vrot.lane.b32.xlu0 %v739, 64
    %v755 = vpop.permute.xlu0 %754
    %v758 = vsel %vm397, %v732, %v745
    %v759 = vsel %vm397, %v733, %v747
    %v760 = vsel %vm397, %v736, %v753
    %v761 = vsel %vm397, %v737, %v755
    %v762 = vpack.c.bf16 %v759, %v758
    %v763 = vpack.c.bf16 %v761, %v760
    %v764 = vpack.c.bf16 %v741, %v740
    %v766 = vlaneseq
    %v767 = vshrl.u32 %v766, 7
    %v768 = vsub.s32 0, %v767
    %v769 = vrot.slane %v729, %v768
    %v811 = vunpack.c.l.b16 %v689
    %v812 = vunpack.c.l.b16 %v690
    %v813 = vunpack.c.l.b16 %v691
    %v814 = vunpack.c.l.b16 %v692
    %v815 = vunpack.c.l.b16 %v693
    %v816 = vunpack.c.l.b16 %v694
    %v817 = vunpack.c.l.b16 %v695
    %v818 = vunpack.c.l.b16 %v696
    %v819 = vunpack.c.l.b16 %v697
    %v820 = vunpack.c.l.b16 %v698
    %v821 = vunpack.c.l.b16 %v699
    %v822 = vunpack.c.l.b16 %v700
    %v823 = vunpack.c.l.b16 %v701
    %v824 = vunpack.c.l.b16 %v702
    %v825 = vunpack.c.l.b16 %v703
    %v826 = vunpack.c.l.b16 %v704
    %v827 = vunpack.c.l.b16 %v705
    %v828 = vunpack.c.l.b16 %v706
    %v829 = vunpack.c.l.b16 %v707
    %v830 = vunpack.c.l.b16 %v708
    %v831 = vunpack.c.l.b16 %v709
    %v832 = vunpack.c.l.b16 %v710
    %v833 = vunpack.c.l.b16 %v711
    %v834 = vunpack.c.l.b16 %v712
    %v835 = vunpack.c.l.b16 %v713
    %v836 = vunpack.c.l.b16 %v714
    %v837 = vunpack.c.l.b16 %v715
    %v838 = vunpack.c.l.b16 %v716
    %v839 = vunpack.c.l.b16 %v717
    %v840 = vunpack.c.l.b16 %v718
    %v841 = vunpack.c.l.b16 %v719
    %v842 = vunpack.c.l.b16 %v720
    %v843 = vunpack.c.l.b16 %v721
    %v844 = vunpack.c.l.b16 %v722
    %v845 = vunpack.c.l.b16 %v723
    %v846 = vunpack.c.l.b16 %v724
    %v847 = vunpack.c.l.b16 %v725
    %v848 = vunpack.c.l.b16 %v726
    %v849 = vunpack.c.l.b16 %v727
    %v850 = vunpack.c.l.b16 %v728
    %v851 = vpack.c.b16 %v812, %v811
    %v852 = vpack.c.b16 %v814, %v813
    %v853 = vpack.c.b16 %v816, %v815
    %v854 = vpack.c.b16 %v818, %v817
    %v855 = vpack.c.b16 %v820, %v819
    %v856 = vpack.c.b16 %v822, %v821
    %v857 = vpack.c.b16 %v824, %v823
    %v858 = vpack.c.b16 %v826, %v825
    %v859 = vpack.c.b16 %v828, %v827
    %v860 = vpack.c.b16 %v830, %v829
    %v861 = vpack.c.b16 %v832, %v831
    %v862 = vpack.c.b16 %v834, %v833
    %v863 = vpack.c.b16 %v836, %v835
    %v864 = vpack.c.b16 %v838, %v837
    %v865 = vpack.c.b16 %v840, %v839
    %v866 = vpack.c.b16 %v842, %v841
    %v867 = vpack.c.b16 %v844, %v843
    %v868 = vpack.c.b16 %v846, %v845
    %v869 = vpack.c.b16 %v848, %v847
    %v870 = vpack.c.b16 %v850, %v849
    %v892 = vsel %vm397, %v764, 0
    %894 = vmatprep.subr.bf16.mxu0 0
    %895 = vmatpush1.bf16.msra.mxu0 %v851
    %896 = vmatprep.subr.bf16.mxu0 0
    %897 = vmatpush1.bf16.msra.mxu0 %v852
    %898 = vmatprep.subr.bf16.mxu0 0
    %899 = vmatpush1.bf16.msra.mxu0 %v853
    %900 = vmatprep.subr.bf16.mxu0 0
    %901 = vmatpush1.bf16.msra.mxu0 %v854
    %902 = vmatprep.subr.bf16.mxu0 0
    %903 = vmatpush1.bf16.msra.mxu0 %v855
    %904 = vmatprep.subr.bf16.mxu0 0
    %905 = vmatpush1.bf16.msra.mxu0 %v856
    %906 = vmatprep.subr.bf16.mxu0 0
    %907 = vmatpush1.bf16.msra.mxu0 %v857
    %908 = vmatprep.subr.bf16.mxu0 0
    %909 = vmatpush1.bf16.msra.mxu0 %v858
    %910 = vmatprep.subr.bf16.mxu0 0
    %911 = vmatpush1.bf16.msra.mxu0 %v859
    %912 = vmatprep.subr.bf16.mxu0 0
    %913 = vmatpush1.bf16.msra.mxu0 %v860
    %914 = vmatprep.subr.bf16.mxu0 0
    %915 = vmatpush1.bf16.msra.mxu0 %v861
    %916 = vmatprep.subr.bf16.mxu0 0
    %917 = vmatpush1.bf16.msra.mxu0 %v862
    %918 = vmatprep.subr.bf16.mxu0 0
    %919 = vmatpush1.bf16.msra.mxu0 %v863
    %920 = vmatprep.subr.bf16.mxu0 0
    %921 = vmatpush1.bf16.msra.mxu0 %v864
    %922 = vmatprep.subr.bf16.mxu0 0
    %923 = vmatpush1.bf16.msra.mxu0 %v865
    %924 = vmatprep.subr.bf16.mxu0 0
    %925 = vmatpush1.bf16.msra.mxu0 %v866
    %926 = vmatprep.mubr.bf16.mxu0 %v763
    %927 = vmatmul.mubr.bf16.gmra.mrb[0].mxu0 %v762
    %v928 = vpop.f32.mrb[0].mxu0
    %v929 = vadd.f32 %v769, %v928
    %v930 = vpop.f32.mrb[0].mxu0
    %v931 = vpop.f32.mrb[0].mxu0
    %v932 = vadd.f32 %v769, %v931
    %v933 = vpop.f32.mrb[0].mxu0
    %934 = vdwg.mxu0
    %935 = vmatprep.subr.bf16.mxu0 0
    %936 = vmatpush1.bf16.msra.mxu0 %v867
    %937 = vmatprep.subr.bf16.mxu0 0
    %938 = vmatpush1.bf16.msra.mxu0 %v868
    %939 = vmatprep.subr.bf16.mxu0 0
    %940 = vmatpush1.bf16.msra.mxu0 %v869
    %941 = vmatprep.subr.bf16.mxu0 0
    %942 = vmatpush1.bf16.msra.mxu0 %v870
    %943 = vmatprep.subr.bf16.mxu0 0
    %944 = vmatpush1.bf16.msra.mxu0 0
    %945 = vmatprep.subr.bf16.mxu0 0
    %946 = vmatpush1.bf16.msra.mxu0 0
    %947 = vmatprep.subr.bf16.mxu0 0
    %948 = vmatpush1.bf16.msra.mxu0 0
    %949 = vmatprep.subr.bf16.mxu0 0
    %950 = vmatpush1.bf16.msra.mxu0 0
    %951 = vmatprep.subr.bf16.mxu0 0
    %952 = vmatpush1.bf16.msra.mxu0 0
    %953 = vmatprep.subr.bf16.mxu0 0
    %954 = vmatpush1.bf16.msra.mxu0 0
    %955 = vmatprep.subr.bf16.mxu0 0
    %956 = vmatpush1.bf16.msra.mxu0 0
    %957 = vmatprep.subr.bf16.mxu0 0
    %958 = vmatpush1.bf16.msra.mxu0 0
    %959 = vmatprep.subr.bf16.mxu0 0
    %960 = vmatpush1.bf16.msra.mxu0 0
    %961 = vmatprep.subr.bf16.mxu0 0
    %962 = vmatpush1.bf16.msra.mxu0 0
    %963 = vmatprep.subr.bf16.mxu0 0
    %964 = vmatpush1.bf16.msra.mxu0 0
    %965 = vmatprep.subr.bf16.mxu0 0
    %966 = vmatpush1.bf16.msra.mxu0 0
    %967 = vmatprep.mubr.bf16.mxu0 0
    %968 = vmatmul.mubr.bf16.gmra.mrb[0].mxu0 %v892
    %v969 = vpop.f32.mrb[0].mxu0
    %v970 = vadd.f32 %v929, %v969
    %v971 = vpop.f32.mrb[0].mxu0
    %v972 = vpop.f32.mrb[0].mxu0
    %v973 = vadd.f32 %v932, %v972
    %v974 = vpop.f32.mrb[0].mxu0
    %975 = vdwg.mxu0
    %v976 = vmax.f32 %v970, 0.0
    %v977 = vmax.f32 %v973, 0.0
    %v978 = vadd.f32 %v976, %v395
    %v979 = vadd.f32 %v977, %v396
    %v980 = vmax.f32 %v978, 0.0
    %v981 = vmax.f32 %v979, 0.0
    %s982 = scalar_lea.vmem %s9, 160
    %v983 = vld [vmem:[%s982] sm:$0xf]
    %v984 = vld [vmem:[%s982 + $0x4] sm:$0xf]
    %v985 = vld [vmem:[%s982 + $0x8] sm:$0xf]
    %v986 = vld [vmem:[%s982 + $0xc] sm:$0xf]
    %v987 = vld [vmem:[%s982 + $0x10] sm:$0xf]
    %v988 = vld [vmem:[%s982 + $0x14] sm:$0xf]
    %v989 = vld [vmem:[%s982 + $0x18] sm:$0xf]
    %v990 = vld [vmem:[%s982 + $0x1c] sm:$0xf]
    %v991 = vld [vmem:[%s982 + $0x20] sm:$0xf]
    %v992 = vld [vmem:[%s982 + $0x24] sm:$0xf]
    %v993 = vld [vmem:[%s982 + $0x28] sm:$0xf]
    %v994 = vld [vmem:[%s982 + $0x2c] sm:$0xf]
    %v995 = vld [vmem:[%s982 + $0x30] sm:$0xf]
    %v996 = vld [vmem:[%s982 + $0x34] sm:$0xf]
    %v997 = vld [vmem:[%s982 + $0x38] sm:$0xf]
    %v998 = vld [vmem:[%s982 + $0x3c] sm:$0xf]
    %v999 = vld [vmem:[%s982 + $0x40] sm:$0xf]
    %v1000 = vld [vmem:[%s982 + $0x44] sm:$0xf]
    %v1001 = vld [vmem:[%s982 + $0x48] sm:$0xf]
    %v1002 = vld [vmem:[%s982 + $0x4c] sm:$0xf]
    %v1003 = vld [vmem:[%s982 + $0x50] sm:$0xf]
    %v1004 = vld [vmem:[%s982 + $0x54] sm:$0xf]
    %v1005 = vld [vmem:[%s982 + $0x58] sm:$0xf]
    %v1006 = vld [vmem:[%s982 + $0x5c] sm:$0xf]
    %v1007 = vld [vmem:[%s982 + $0x60] sm:$0xf]
    %v1008 = vld [vmem:[%s982 + $0x64] sm:$0xf]
    %v1009 = vld [vmem:[%s982 + $0x68] sm:$0xf]
    %v1010 = vld [vmem:[%s982 + $0x6c] sm:$0xf]
    %v1011 = vld [vmem:[%s982 + $0x70] sm:$0xf]
    %v1012 = vld [vmem:[%s982 + $0x74] sm:$0xf]
    %v1013 = vld [vmem:[%s982 + $0x78] sm:$0xf]
    %v1014 = vld [vmem:[%s982 + $0x7c] sm:$0xf]
    %v1015 = vld [vmem:[%s982 + $0x80] sm:$0xf]
    %v1016 = vld [vmem:[%s982 + $0x84] sm:$0xf]
    %v1017 = vld [vmem:[%s982 + $0x88] sm:$0xf]
    %v1018 = vld [vmem:[%s982 + $0x8c] sm:$0xf]
    %v1019 = vld [vmem:[%s982 + $0x90] sm:$0xf]
    %v1020 = vld [vmem:[%s982 + $0x94] sm:$0xf]
    %v1021 = vld [vmem:[%s982 + $0x98] sm:$0xf]
    %v1022 = vld [vmem:[%s982 + $0x9c] sm:$0xf]
    %s1023 = scalar_lea.vmem %s10, 1
    %v1024 = vld [vmem:[%s1023] sm:$0x1]
    %1025 = vst.msk [vmem:[#allocation2 + $0x8] sm:$0xff] %vm397, %v980
    %1026 = vst.msk [vmem:[#allocation2 + $0x18] sm:$0xff] %vm397, %v981
    %v1027 = vld [vmem:[#allocation2] sm:$0xff]
    %v1028 = vld [vmem:[#allocation2 + $0x10] sm:$0xff]
    %v1029 = vld [vmem:[#allocation2 + $0x2] sm:$0xff]
    %v1030 = vld [vmem:[#allocation2 + $0x12] sm:$0xff]
    %v1031 = vld [vmem:[#allocation2 + $0x4] sm:$0xff]
    %v1032 = vld [vmem:[#allocation2 + $0x14] sm:$0xff]
    %v1033 = vld [vmem:[#allocation2 + $0x6] sm:$0xff]
    %v1034 = vld [vmem:[#allocation2 + $0x16] sm:$0xff]
    %v1035 = vld [vmem:[#allocation2 + $0x8] sm:$0xff]
    %v1036 = vld [vmem:[#allocation2 + $0x18] sm:$0xff]
    %1039 = vrot.lane.b32.xlu0 %v1029, 64
    %v1040 = vpop.permute.xlu0 %1039
    %1041 = vrot.lane.b32.xlu0 %v1030, 64
    %v1042 = vpop.permute.xlu0 %1041
    %1047 = vrot.lane.b32.xlu0 %v1033, 64
    %v1048 = vpop.permute.xlu0 %1047
    %1049 = vrot.lane.b32.xlu0 %v1034, 64
    %v1050 = vpop.permute.xlu0 %1049
    %v1053 = vsel %vm397, %v1027, %v1040
    %v1054 = vsel %vm397, %v1028, %v1042
    %v1055 = vsel %vm397, %v1031, %v1048
    %v1056 = vsel %vm397, %v1032, %v1050
    %v1057 = vpack.c.bf16 %v1054, %v1053
    %v1058 = vpack.c.bf16 %v1056, %v1055
    %v1059 = vpack.c.bf16 %v1036, %v1035
    %v1061 = vlaneseq
    %v1062 = vshrl.u32 %v1061, 7
    %v1063 = vsub.s32 0, %v1062
    %v1064 = vrot.slane %v1024, %v1063
    %v1106 = vunpack.c.l.b16 %v983
    %v1107 = vunpack.c.l.b16 %v984
    %v1108 = vunpack.c.l.b16 %v985
    %v1109 = vunpack.c.l.b16 %v986
    %v1110 = vunpack.c.l.b16 %v987
    %v1111 = vunpack.c.l.b16 %v988
    %v1112 = vunpack.c.l.b16 %v989
    %v1113 = vunpack.c.l.b16 %v990
    %v1114 = vunpack.c.l.b16 %v991
    %v1115 = vunpack.c.l.b16 %v992
    %v1116 = vunpack.c.l.b16 %v993
    %v1117 = vunpack.c.l.b16 %v994
    %v1118 = vunpack.c.l.b16 %v995
    %v1119 = vunpack.c.l.b16 %v996
    %v1120 = vunpack.c.l.b16 %v997
    %v1121 = vunpack.c.l.b16 %v998
    %v1122 = vunpack.c.l.b16 %v999
    %v1123 = vunpack.c.l.b16 %v1000
    %v1124 = vunpack.c.l.b16 %v1001
    %v1125 = vunpack.c.l.b16 %v1002
    %v1126 = vunpack.c.l.b16 %v1003
    %v1127 = vunpack.c.l.b16 %v1004
    %v1128 = vunpack.c.l.b16 %v1005
    %v1129 = vunpack.c.l.b16 %v1006
    %v1130 = vunpack.c.l.b16 %v1007
    %v1131 = vunpack.c.l.b16 %v1008
    %v1132 = vunpack.c.l.b16 %v1009
    %v1133 = vunpack.c.l.b16 %v1010
    %v1134 = vunpack.c.l.b16 %v1011
    %v1135 = vunpack.c.l.b16 %v1012
    %v1136 = vunpack.c.l.b16 %v1013
    %v1137 = vunpack.c.l.b16 %v1014
    %v1138 = vunpack.c.l.b16 %v1015
    %v1139 = vunpack.c.l.b16 %v1016
    %v1140 = vunpack.c.l.b16 %v1017
    %v1141 = vunpack.c.l.b16 %v1018
    %v1142 = vunpack.c.l.b16 %v1019
    %v1143 = vunpack.c.l.b16 %v1020
    %v1144 = vunpack.c.l.b16 %v1021
    %v1145 = vunpack.c.l.b16 %v1022
    %v1146 = vpack.c.b16 %v1107, %v1106
    %v1147 = vpack.c.b16 %v1109, %v1108
    %v1148 = vpack.c.b16 %v1111, %v1110
    %v1149 = vpack.c.b16 %v1113, %v1112
    %v1150 = vpack.c.b16 %v1115, %v1114
    %v1151 = vpack.c.b16 %v1117, %v1116
    %v1152 = vpack.c.b16 %v1119, %v1118
    %v1153 = vpack.c.b16 %v1121, %v1120
    %v1154 = vpack.c.b16 %v1123, %v1122
    %v1155 = vpack.c.b16 %v1125, %v1124
    %v1156 = vpack.c.b16 %v1127, %v1126
    %v1157 = vpack.c.b16 %v1129, %v1128
    %v1158 = vpack.c.b16 %v1131, %v1130
    %v1159 = vpack.c.b16 %v1133, %v1132
    %v1160 = vpack.c.b16 %v1135, %v1134
    %v1161 = vpack.c.b16 %v1137, %v1136
    %v1162 = vpack.c.b16 %v1139, %v1138
    %v1163 = vpack.c.b16 %v1141, %v1140
    %v1164 = vpack.c.b16 %v1143, %v1142
    %v1165 = vpack.c.b16 %v1145, %v1144
    %v1187 = vsel %vm397, %v1059, 0
    %1189 = vmatprep.subr.bf16.mxu0 0
    %1190 = vmatpush1.bf16.msra.mxu0 %v1146
    %1191 = vmatprep.subr.bf16.mxu0 0
    %1192 = vmatpush1.bf16.msra.mxu0 %v1147
    %1193 = vmatprep.subr.bf16.mxu0 0
    %1194 = vmatpush1.bf16.msra.mxu0 %v1148
    %1195 = vmatprep.subr.bf16.mxu0 0
    %1196 = vmatpush1.bf16.msra.mxu0 %v1149
    %1197 = vmatprep.subr.bf16.mxu0 0
    %1198 = vmatpush1.bf16.msra.mxu0 %v1150
    %1199 = vmatprep.subr.bf16.mxu0 0
    %1200 = vmatpush1.bf16.msra.mxu0 %v1151
    %1201 = vmatprep.subr.bf16.mxu0 0
    %1202 = vmatpush1.bf16.msra.mxu0 %v1152
    %1203 = vmatprep.subr.bf16.mxu0 0
    %1204 = vmatpush1.bf16.msra.mxu0 %v1153
    %1205 = vmatprep.subr.bf16.mxu0 0
    %1206 = vmatpush1.bf16.msra.mxu0 %v1154
    %1207 = vmatprep.subr.bf16.mxu0 0
    %1208 = vmatpush1.bf16.msra.mxu0 %v1155
    %1209 = vmatprep.subr.bf16.mxu0 0
    %1210 = vmatpush1.bf16.msra.mxu0 %v1156
    %1211 = vmatprep.subr.bf16.mxu0 0
    %1212 = vmatpush1.bf16.msra.mxu0 %v1157
    %1213 = vmatprep.subr.bf16.mxu0 0
    %1214 = vmatpush1.bf16.msra.mxu0 %v1158
    %1215 = vmatprep.subr.bf16.mxu0 0
    %1216 = vmatpush1.bf16.msra.mxu0 %v1159
    %1217 = vmatprep.subr.bf16.mxu0 0
    %1218 = vmatpush1.bf16.msra.mxu0 %v1160
    %1219 = vmatprep.subr.bf16.mxu0 0
    %1220 = vmatpush1.bf16.msra.mxu0 %v1161
    %1221 = vmatprep.mubr.bf16.mxu0 %v1058
    %1222 = vmatmul.mubr.bf16.gmra.mrb[0].mxu0 %v1057
    %v1223 = vpop.f32.mrb[0].mxu0
    %v1224 = vadd.f32 %v1064, %v1223
    %v1225 = vpop.f32.mrb[0].mxu0
    %v1226 = vpop.f32.mrb[0].mxu0
    %v1227 = vadd.f32 %v1064, %v1226
    %v1228 = vpop.f32.mrb[0].mxu0
    %1229 = vdwg.mxu0
    %1230 = vmatprep.subr.bf16.mxu0 0
    %1231 = vmatpush1.bf16.msra.mxu0 %v1162
    %1232 = vmatprep.subr.bf16.mxu0 0
    %1233 = vmatpush1.bf16.msra.mxu0 %v1163
    %1234 = vmatprep.subr.bf16.mxu0 0
    %1235 = vmatpush1.bf16.msra.mxu0 %v1164
    %1236 = vmatprep.subr.bf16.mxu0 0
    %1237 = vmatpush1.bf16.msra.mxu0 %v1165
    %1238 = vmatprep.subr.bf16.mxu0 0
    %1239 = vmatpush1.bf16.msra.mxu0 0
    %1240 = vmatprep.subr.bf16.mxu0 0
    %1241 = vmatpush1.bf16.msra.mxu0 0
    %1242 = vmatprep.subr.bf16.mxu0 0
    %1243 = vmatpush1.bf16.msra.mxu0 0
    %1244 = vmatprep.subr.bf16.mxu0 0
    %1245 = vmatpush1.bf16.msra.mxu0 0
    %1246 = vmatprep.subr.bf16.mxu0 0
    %1247 = vmatpush1.bf16.msra.mxu0 0
    %1248 = vmatprep.subr.bf16.mxu0 0
    %1249 = vmatpush1.bf16.msra.mxu0 0
    %1250 = vmatprep.subr.bf16.mxu0 0
    %1251 = vmatpush1.bf16.msra.mxu0 0
    %1252 = vmatprep.subr.bf16.mxu0 0
    %1253 = vmatpush1.bf16.msra.mxu0 0
    %1254 = vmatprep.subr.bf16.mxu0 0
    %1255 = vmatpush1.bf16.msra.mxu0 0
    %1256 = vmatprep.subr.bf16.mxu0 0
    %1257 = vmatpush1.bf16.msra.mxu0 0
    %1258 = vmatprep.subr.bf16.mxu0 0
    %1259 = vmatpush1.bf16.msra.mxu0 0
    %1260 = vmatprep.subr.bf16.mxu0 0
    %1261 = vmatpush1.bf16.msra.mxu0 0
    %1262 = vmatprep.mubr.bf16.mxu0 0
    %1263 = vmatmul.mubr.bf16.gmra.mrb[0].mxu0 %v1187
    %v1264 = vpop.f32.mrb[0].mxu0
    %v1265 = vadd.f32 %v1224, %v1264
    %v1266 = vpop.f32.mrb[0].mxu0
    %v1267 = vpop.f32.mrb[0].mxu0
    %v1268 = vadd.f32 %v1227, %v1267
    %v1269 = vpop.f32.mrb[0].mxu0
    %1270 = vdwg.mxu0
    %v1271 = vmax.f32 %v1265, 0.0
    %v1272 = vmax.f32 %v1268, 0.0
    %s1273 = scalar_lea.vmem %s11, 160
    %v1274 = vld [vmem:[%s1273] sm:$0xf]
    %v1275 = vld [vmem:[%s1273 + $0x4] sm:$0xf]
    %v1276 = vld [vmem:[%s1273 + $0x8] sm:$0xf]
    %v1277 = vld [vmem:[%s1273 + $0xc] sm:$0xf]
    %v1278 = vld [vmem:[%s1273 + $0x10] sm:$0xf]
    %v1279 = vld [vmem:[%s1273 + $0x14] sm:$0xf]
    %v1280 = vld [vmem:[%s1273 + $0x18] sm:$0xf]
    %v1281 = vld [vmem:[%s1273 + $0x1c] sm:$0xf]
    %v1282 = vld [vmem:[%s1273 + $0x20] sm:$0xf]
    %v1283 = vld [vmem:[%s1273 + $0x24] sm:$0xf]
    %v1284 = vld [vmem:[%s1273 + $0x28] sm:$0xf]
    %v1285 = vld [vmem:[%s1273 + $0x2c] sm:$0xf]
    %v1286 = vld [vmem:[%s1273 + $0x30] sm:$0xf]
    %v1287 = vld [vmem:[%s1273 + $0x34] sm:$0xf]
    %v1288 = vld [vmem:[%s1273 + $0x38] sm:$0xf]
    %v1289 = vld [vmem:[%s1273 + $0x3c] sm:$0xf]
    %v1290 = vld [vmem:[%s1273 + $0x40] sm:$0xf]
    %v1291 = vld [vmem:[%s1273 + $0x44] sm:$0xf]
    %v1292 = vld [vmem:[%s1273 + $0x48] sm:$0xf]
    %v1293 = vld [vmem:[%s1273 + $0x4c] sm:$0xf]
    %v1294 = vld [vmem:[%s1273 + $0x50] sm:$0xf]
    %v1295 = vld [vmem:[%s1273 + $0x54] sm:$0xf]
    %v1296 = vld [vmem:[%s1273 + $0x58] sm:$0xf]
    %v1297 = vld [vmem:[%s1273 + $0x5c] sm:$0xf]
    %v1298 = vld [vmem:[%s1273 + $0x60] sm:$0xf]
    %v1299 = vld [vmem:[%s1273 + $0x64] sm:$0xf]
    %v1300 = vld [vmem:[%s1273 + $0x68] sm:$0xf]
    %v1301 = vld [vmem:[%s1273 + $0x6c] sm:$0xf]
    %v1302 = vld [vmem:[%s1273 + $0x70] sm:$0xf]
    %v1303 = vld [vmem:[%s1273 + $0x74] sm:$0xf]
    %v1304 = vld [vmem:[%s1273 + $0x78] sm:$0xf]
    %v1305 = vld [vmem:[%s1273 + $0x7c] sm:$0xf]
    %v1306 = vld [vmem:[%s1273 + $0x80] sm:$0xf]
    %v1307 = vld [vmem:[%s1273 + $0x84] sm:$0xf]
    %v1308 = vld [vmem:[%s1273 + $0x88] sm:$0xf]
    %v1309 = vld [vmem:[%s1273 + $0x8c] sm:$0xf]
    %v1310 = vld [vmem:[%s1273 + $0x90] sm:$0xf]
    %v1311 = vld [vmem:[%s1273 + $0x94] sm:$0xf]
    %v1312 = vld [vmem:[%s1273 + $0x98] sm:$0xf]
    %v1313 = vld [vmem:[%s1273 + $0x9c] sm:$0xf]
    %s1314 = scalar_lea.vmem %s12, 1
    %v1315 = vld [vmem:[%s1314] sm:$0x1]
    %1316 = vst.msk [vmem:[#allocation2 + $0x8] sm:$0xff] %vm397, %v1271
    %1317 = vst.msk [vmem:[#allocation2 + $0x18] sm:$0xff] %vm397, %v1272
    %v1318 = vld [vmem:[#allocation2] sm:$0xff]
    %v1319 = vld [vmem:[#allocation2 + $0x10] sm:$0xff]
    %v1320 = vld [vmem:[#allocation2 + $0x2] sm:$0xff]
    %v1321 = vld [vmem:[#allocation2 + $0x12] sm:$0xff]
    %v1322 = vld [vmem:[#allocation2 + $0x4] sm:$0xff]
    %v1323 = vld [vmem:[#allocation2 + $0x14] sm:$0xff]
    %v1324 = vld [vmem:[#allocation2 + $0x6] sm:$0xff]
    %v1325 = vld [vmem:[#allocation2 + $0x16] sm:$0xff]
    %v1326 = vld [vmem:[#allocation2 + $0x8] sm:$0xff]
    %v1327 = vld [vmem:[#allocation2 + $0x18] sm:$0xff]
    %1330 = vrot.lane.b32.xlu0 %v1320, 64
    %v1331 = vpop.permute.xlu0 %1330
    %1332 = vrot.lane.b32.xlu0 %v1321, 64
    %v1333 = vpop.permute.xlu0 %1332
    %1338 = vrot.lane.b32.xlu0 %v1324, 64
    %v1339 = vpop.permute.xlu0 %1338
    %1340 = vrot.lane.b32.xlu0 %v1325, 64
    %v1341 = vpop.permute.xlu0 %1340
    %v1344 = vsel %vm397, %v1318, %v1331
    %v1345 = vsel %vm397, %v1319, %v1333
    %v1346 = vsel %vm397, %v1322, %v1339
    %v1347 = vsel %vm397, %v1323, %v1341
    %v1348 = vpack.c.bf16 %v1345, %v1344
    %v1349 = vpack.c.bf16 %v1347, %v1346
    %v1350 = vpack.c.bf16 %v1327, %v1326
    %v1352 = vlaneseq
    %v1353 = vshrl.u32 %v1352, 7
    %v1354 = vsub.s32 0, %v1353
    %v1355 = vrot.slane %v1315, %v1354
    %v1397 = vunpack.c.l.b16 %v1274
    %v1398 = vunpack.c.l.b16 %v1275
    %v1399 = vunpack.c.l.b16 %v1276
    %v1400 = vunpack.c.l.b16 %v1277
    %v1401 = vunpack.c.l.b16 %v1278
    %v1402 = vunpack.c.l.b16 %v1279
    %v1403 = vunpack.c.l.b16 %v1280
    %v1404 = vunpack.c.l.b16 %v1281
    %v1405 = vunpack.c.l.b16 %v1282
    %v1406 = vunpack.c.l.b16 %v1283
    %v1407 = vunpack.c.l.b16 %v1284
    %v1408 = vunpack.c.l.b16 %v1285
    %v1409 = vunpack.c.l.b16 %v1286
    %v1410 = vunpack.c.l.b16 %v1287
    %v1411 = vunpack.c.l.b16 %v1288
    %v1412 = vunpack.c.l.b16 %v1289
    %v1413 = vunpack.c.l.b16 %v1290
    %v1414 = vunpack.c.l.b16 %v1291
    %v1415 = vunpack.c.l.b16 %v1292
    %v1416 = vunpack.c.l.b16 %v1293
    %v1417 = vunpack.c.l.b16 %v1294
    %v1418 = vunpack.c.l.b16 %v1295
    %v1419 = vunpack.c.l.b16 %v1296
    %v1420 = vunpack.c.l.b16 %v1297
    %v1421 = vunpack.c.l.b16 %v1298
    %v1422 = vunpack.c.l.b16 %v1299
    %v1423 = vunpack.c.l.b16 %v1300
    %v1424 = vunpack.c.l.b16 %v1301
    %v1425 = vunpack.c.l.b16 %v1302
    %v1426 = vunpack.c.l.b16 %v1303
    %v1427 = vunpack.c.l.b16 %v1304
    %v1428 = vunpack.c.l.b16 %v1305
    %v1429 = vunpack.c.l.b16 %v1306
    %v1430 = vunpack.c.l.b16 %v1307
    %v1431 = vunpack.c.l.b16 %v1308
    %v1432 = vunpack.c.l.b16 %v1309
    %v1433 = vunpack.c.l.b16 %v1310
    %v1434 = vunpack.c.l.b16 %v1311
    %v1435 = vunpack.c.l.b16 %v1312
    %v1436 = vunpack.c.l.b16 %v1313
    %v1437 = vpack.c.b16 %v1398, %v1397
    %v1438 = vpack.c.b16 %v1400, %v1399
    %v1439 = vpack.c.b16 %v1402, %v1401
    %v1440 = vpack.c.b16 %v1404, %v1403
    %v1441 = vpack.c.b16 %v1406, %v1405
    %v1442 = vpack.c.b16 %v1408, %v1407
    %v1443 = vpack.c.b16 %v1410, %v1409
    %v1444 = vpack.c.b16 %v1412, %v1411
    %v1445 = vpack.c.b16 %v1414, %v1413
    %v1446 = vpack.c.b16 %v1416, %v1415
    %v1447 = vpack.c.b16 %v1418, %v1417
    %v1448 = vpack.c.b16 %v1420, %v1419
    %v1449 = vpack.c.b16 %v1422, %v1421
    %v1450 = vpack.c.b16 %v1424, %v1423
    %v1451 = vpack.c.b16 %v1426, %v1425
    %v1452 = vpack.c.b16 %v1428, %v1427
    %v1453 = vpack.c.b16 %v1430, %v1429
    %v1454 = vpack.c.b16 %v1432, %v1431
    %v1455 = vpack.c.b16 %v1434, %v1433
    %v1456 = vpack.c.b16 %v1436, %v1435
    %v1478 = vsel %vm397, %v1350, 0
    %1480 = vmatprep.subr.bf16.mxu0 0
    %1481 = vmatpush1.bf16.msra.mxu0 %v1437
    %1482 = vmatprep.subr.bf16.mxu0 0
    %1483 = vmatpush1.bf16.msra.mxu0 %v1438
    %1484 = vmatprep.subr.bf16.mxu0 0
    %1485 = vmatpush1.bf16.msra.mxu0 %v1439
    %1486 = vmatprep.subr.bf16.mxu0 0
    %1487 = vmatpush1.bf16.msra.mxu0 %v1440
    %1488 = vmatprep.subr.bf16.mxu0 0
    %1489 = vmatpush1.bf16.msra.mxu0 %v1441
    %1490 = vmatprep.subr.bf16.mxu0 0
    %1491 = vmatpush1.bf16.msra.mxu0 %v1442
    %1492 = vmatprep.subr.bf16.mxu0 0
    %1493 = vmatpush1.bf16.msra.mxu0 %v1443
    %1494 = vmatprep.subr.bf16.mxu0 0
    %1495 = vmatpush1.bf16.msra.mxu0 %v1444
    %1496 = vmatprep.subr.bf16.mxu0 0
    %1497 = vmatpush1.bf16.msra.mxu0 %v1445
    %1498 = vmatprep.subr.bf16.mxu0 0
    %1499 = vmatpush1.bf16.msra.mxu0 %v1446
    %1500 = vmatprep.subr.bf16.mxu0 0
    %1501 = vmatpush1.bf16.msra.mxu0 %v1447
    %1502 = vmatprep.subr.bf16.mxu0 0
    %1503 = vmatpush1.bf16.msra.mxu0 %v1448
    %1504 = vmatprep.subr.bf16.mxu0 0
    %1505 = vmatpush1.bf16.msra.mxu0 %v1449
    %1506 = vmatprep.subr.bf16.mxu0 0
    %1507 = vmatpush1.bf16.msra.mxu0 %v1450
    %1508 = vmatprep.subr.bf16.mxu0 0
    %1509 = vmatpush1.bf16.msra.mxu0 %v1451
    %1510 = vmatprep.subr.bf16.mxu0 0
    %1511 = vmatpush1.bf16.msra.mxu0 %v1452
    %1512 = vmatprep.mubr.bf16.mxu0 %v1349
    %1513 = vmatmul.mubr.bf16.gmra.mrb[0].mxu0 %v1348
    %v1514 = vpop.f32.mrb[0].mxu0
    %v1515 = vadd.f32 %v1355, %v1514
    %v1516 = vpop.f32.mrb[0].mxu0
    %v1517 = vpop.f32.mrb[0].mxu0
    %v1518 = vadd.f32 %v1355, %v1517
    %v1519 = vpop.f32.mrb[0].mxu0
    %1520 = vdwg.mxu0
    %1521 = vmatprep.subr.bf16.mxu0 0
    %1522 = vmatpush1.bf16.msra.mxu0 %v1453
    %1523 = vmatprep.subr.bf16.mxu0 0
    %1524 = vmatpush1.bf16.msra.mxu0 %v1454
    %1525 = vmatprep.subr.bf16.mxu0 0
    %1526 = vmatpush1.bf16.msra.mxu0 %v1455
    %1527 = vmatprep.subr.bf16.mxu0 0
    %1528 = vmatpush1.bf16.msra.mxu0 %v1456
    %1529 = vmatprep.subr.bf16.mxu0 0
    %1530 = vmatpush1.bf16.msra.mxu0 0
    %1531 = vmatprep.subr.bf16.mxu0 0
    %1532 = vmatpush1.bf16.msra.mxu0 0
    %1533 = vmatprep.subr.bf16.mxu0 0
    %1534 = vmatpush1.bf16.msra.mxu0 0
    %1535 = vmatprep.subr.bf16.mxu0 0
    %1536 = vmatpush1.bf16.msra.mxu0 0
    %1537 = vmatprep.subr.bf16.mxu0 0
    %1538 = vmatpush1.bf16.msra.mxu0 0
    %1539 = vmatprep.subr.bf16.mxu0 0
    %1540 = vmatpush1.bf16.msra.mxu0 0
    %1541 = vmatprep.subr.bf16.mxu0 0
    %1542 = vmatpush1.bf16.msra.mxu0 0
    %1543 = vmatprep.subr.bf16.mxu0 0
    %1544 = vmatpush1.bf16.msra.mxu0 0
    %1545 = vmatprep.subr.bf16.mxu0 0
    %1546 = vmatpush1.bf16.msra.mxu0 0
    %1547 = vmatprep.subr.bf16.mxu0 0
    %1548 = vmatpush1.bf16.msra.mxu0 0
    %1549 = vmatprep.subr.bf16.mxu0 0
    %1550 = vmatpush1.bf16.msra.mxu0 0
    %1551 = vmatprep.subr.bf16.mxu0 0
    %1552 = vmatpush1.bf16.msra.mxu0 0
    %1553 = vmatprep.mubr.bf16.mxu0 0
    %1554 = vmatmul.mubr.bf16.gmra.mrb[0].mxu0 %v1478
    %v1555 = vpop.f32.mrb[0].mxu0
    %v1556 = vadd.f32 %v1515, %v1555
    %v1557 = vpop.f32.mrb[0].mxu0
    %v1558 = vpop.f32.mrb[0].mxu0
    %v1559 = vadd.f32 %v1518, %v1558
    %v1560 = vpop.f32.mrb[0].mxu0
    %1561 = vdwg.mxu0
    %v1562 = vmax.f32 %v1556, 0.0
    %v1563 = vmax.f32 %v1559, 0.0
    %v1564 = vadd.f32 %v1562, %v980
    %v1565 = vadd.f32 %v1563, %v981
    %v1566 = vmax.f32 %v1564, 0.0
    %v1567 = vmax.f32 %v1565, 0.0
    %v1568 = vpack.c.bf16 %v1566, %v1566
    %v1569 = vpack.c.bf16 %v1567, %v1567
    %v1570 = vld [vmem:[%s13] sm:$0xf]
    %v1571 = vld [vmem:[%s13 + $0x4] sm:$0xf]
    %v1572 = vld [vmem:[%s13 + $0x8] sm:$0xf]
    %v1573 = vld [vmem:[%s13 + $0xc] sm:$0xf]
    %v1574 = vld [vmem:[%s13 + $0x10] sm:$0xf]
    %v1575 = vld [vmem:[%s13 + $0x14] sm:$0xf]
    %v1576 = vld [vmem:[%s13 + $0x18] sm:$0xf]
    %v1577 = vld [vmem:[%s13 + $0x1c] sm:$0xf]
    %v1578 = vld [vmem:[%s14] sm:$0x1]
    %v1580 = vlaneseq
    %v1581 = vshrl.u32 %v1580, 7
    %v1582 = vsub.s32 0, %v1581
    %v1583 = vrot.slane %v1578, %v1582
    %v1587 = vunpack.c.l.b16 %v1568
    %v1588 = vunpack.c.l.b16 %v1569
    %v1589 = vrot.slane %v1587, 7
    %v1590 = vrot.slane %v1588, 6
    %vm1591 = vcmask 1041409
    %v1592 = vsel %vm1591, %v1590, %v1589
    %v1593 = vpack.c.b16 %v1592, %v1592
    %v1602 = vunpack.c.l.b16 %v1570
    %v1603 = vunpack.c.l.b16 %v1571
    %v1604 = vunpack.c.l.b16 %v1572
    %v1605 = vunpack.c.l.b16 %v1573
    %v1606 = vunpack.c.l.b16 %v1574
    %v1607 = vunpack.c.l.b16 %v1575
    %v1608 = vunpack.c.l.b16 %v1576
    %v1609 = vunpack.c.l.b16 %v1577
    %v1610 = vpack.c.b16 %v1603, %v1602
    %v1611 = vpack.c.b16 %v1605, %v1604
    %v1612 = vpack.c.b16 %v1607, %v1606
    %v1613 = vpack.c.b16 %v1609, %v1608
    %v1619 = vsel %vm397, %v1593, 0
    %1621 = vmatprep.subr.bf16.mxu0 0
    %1622 = vmatpush1.bf16.msra.mxu0 %v1610
    %1623 = vmatprep.subr.bf16.mxu0 0
    %1624 = vmatpush1.bf16.msra.mxu0 %v1611
    %1625 = vmatprep.subr.bf16.mxu0 0
    %1626 = vmatpush1.bf16.msra.mxu0 %v1612
    %1627 = vmatprep.subr.bf16.mxu0 0
    %1628 = vmatpush1.bf16.msra.mxu0 %v1613
    %1629 = vmatprep.subr.bf16.mxu0 0
    %1630 = vmatpush1.bf16.msra.mxu0 0
    %1631 = vmatprep.subr.bf16.mxu0 0
    %1632 = vmatpush1.bf16.msra.mxu0 0
    %1633 = vmatprep.subr.bf16.mxu0 0
    %1634 = vmatpush1.bf16.msra.mxu0 0
    %1635 = vmatprep.subr.bf16.mxu0 0
    %1636 = vmatpush1.bf16.msra.mxu0 0
    %1637 = vmatprep.subr.bf16.mxu0 0
    %1638 = vmatpush1.bf16.msra.mxu0 0
    %1639 = vmatprep.subr.bf16.mxu0 0
    %1640 = vmatpush1.bf16.msra.mxu0 0
    %1641 = vmatprep.subr.bf16.mxu0 0
    %1642 = vmatpush1.bf16.msra.mxu0 0
    %1643 = vmatprep.subr.bf16.mxu0 0
    %1644 = vmatpush1.bf16.msra.mxu0 0
    %1645 = vmatprep.subr.bf16.mxu0 0
    %1646 = vmatpush1.bf16.msra.mxu0 0
    %1647 = vmatprep.subr.bf16.mxu0 0
    %1648 = vmatpush1.bf16.msra.mxu0 0
    %1649 = vmatprep.subr.bf16.mxu0 0
    %1650 = vmatpush1.bf16.msra.mxu0 0
    %1651 = vmatprep.subr.bf16.mxu0 0
    %1652 = vmatpush1.bf16.msra.mxu0 0
    %1653 = vmatprep.mubr.bf16.mxu0 0
    %1654 = vmatmul.mubr.bf16.gmra.mrb[0].mxu0 %v1619
    %v1655 = vpop.f32.mrb[0].mxu0
    %v1656 = vadd.f32 %v1583, %v1655
    %v1657 = vpop.f32.mrb[0].mxu0
    %v1658 = vpop.f32.mrb[0].mxu0
    %v1659 = vpop.f32.mrb[0].mxu0
    %1660 = vdwg.mxu0
    %vm1661 = vcmask 9216
    %1662 = vst.msk [vmem:[#allocation3] sm:$0x3] %vm1661, %v1656
    // Predicated region
    $region62: #{t_cnn_tcn_forward.1} parent=1 // pred_check
      _
    $region63: #{t_cnn_tcn_forward.1} parent=1 // pred_check_branch
      %1664 = sbr.rel (0) target = $region65
    $region64: #{t_cnn_tcn_forward.1} parent=1 // pred_region
      %s1666 = ssub.s32 32, 32
      %1667 = vsyncadd [#allocation4], %s1666
      %s1669 = sshll.u32 [#allocation3], 4
      %s1670 = int_to_ptr.vmem [resolvable:$true] %s1669
      %1672 = dma.vmem_to_hbm [thread:$0]  %s1670, 32, %s15, [#allocation4]
    $region65: #{t_cnn_tcn_forward.1} parent=1 // pred_fallthru
      _
    // Predicated region
    $region66: #{t_cnn_tcn_forward.1} parent=1 // pred_check
      _
    $region67: #{t_cnn_tcn_forward.1} parent=1 // pred_check_branch
      %1674 = sbr.rel (0) target = $region69
    $region68: #{t_cnn_tcn_forward.1} parent=1 // pred_region
      %1675 = dma.done [#allocation4], 32
    $region69: #{t_cnn_tcn_forward.1} parent=1 // pred_fallthru
      _
    %1676 = vsyncpa [#allocation4], 1

</llo_original>
